<compile_context>
chip_gen: v5e
topology: v5e:2x2
jax: 0.10.0
libtpu: 0.0.40
codegen_flags: <defaults>
</compile_context>

<pallas_src>
import math

import jax
import jax.numpy as jnp
from jax.experimental import pallas as pl
from jax.experimental.pallas import tpu as pltpu


def _round_up(x, m):
    return (x + m - 1) // m * m


def _build_kernel(L, hidden_size, t_pad, T):
    """Fused hypernetwork forward kernel (training branch of forward())."""
    Hs = hidden_size          # GRU input size
    HID = 2 * Hs              # GRU hidden size per direction
    D = 4 * Hs                # bi-GRU output width == LayerNorm normalized dim
    W = 2 * HID               # fused (fwd|bwd) hidden width (== D)
    inv_T = 1.0 / T

    def kernel(x2_ref, wih_ref, whh_ref, bias_ref, ln_ref, gumb_ref,
               linw_hbm, out_ref, linw_vmem, dma_sem):
        # Kick off the head-weight DMA immediately; it finishes under the recurrence.
        head_cp = pltpu.make_async_copy(linw_hbm, linw_vmem, dma_sem)
        head_cp.start()

        x2 = x2_ref[...].astype(jnp.float32)          # (L, 2*Hs): [x_t | x_{L-1-t}]
        wih = wih_ref[...].astype(jnp.float32)        # (2*Hs, 3*W) gate-interleaved
        whh = whh_ref[...].astype(jnp.float32)        # (W, 3*W)   block-diag, interleaved
        bih = bias_ref[0:1, :].astype(jnp.float32)    # (1, 3*W)
        bhh = bias_ref[1:2, :].astype(jnp.float32)    # (1, 3*W)
        ln_w = ln_ref[0:1, :].astype(jnp.float32)     # (1, D)
        ln_b = ln_ref[1:2, :].astype(jnp.float32)     # (1, D)
        gumb = gumb_ref[...].astype(jnp.float32)      # (L, t_pad), base already folded in

        # Input projection for BOTH directions and all timesteps in one MXU call.
        # Row s carries fwd gates for timestep s and bwd gates for timestep L-1-s.
        gi_all = jnp.dot(x2, wih, preferred_element_type=jnp.float32) + bih   # (L, 3*W)

        # Fused bidirectional recurrence: one L-step serial chain instead of 2*L.
        h = jnp.zeros((1, W), jnp.float32)            # [h_fwd | h_bwd]; h0 is zeros
        hs = []
        for s in range(L):                            # L is static -> fully unrolled
            gi = gi_all[s:s + 1, :]
            gh = jnp.dot(h, whh, preferred_element_type=jnp.float32) + bhh
            # PyTorch GRU gate order [r, z, n]; each slab is 128-lane aligned.
            r = jax.nn.sigmoid(gi[:, 0:W] + gh[:, 0:W])
            z = jax.nn.sigmoid(gi[:, W:2 * W] + gh[:, W:2 * W])
            n = jnp.tanh(gi[:, 2 * W:3 * W] + r * gh[:, 2 * W:3 * W])
            h = (1.0 - z) * n + z * h
            hs.append(h)                              # (1, W)

        # Bi-GRU output[t] = concat(h_fwd[t], h_bwd[t]).  The bwd hidden of timestep t
        # lives in fused step s = L-1-t, so pair the fwd half with the reversed list's
        # bwd half.  Built once as a lane-dense (L, D) slab.
        h_seq = jnp.concatenate(hs, axis=0)           # (L, W)
        h_rev = jnp.concatenate(hs[::-1], axis=0)     # (L, W)
        seq = jnp.concatenate([h_seq[:, 0:HID], h_rev[:, HID:W]], axis=1)     # (L, D)

        # LayerNorm([4 * hidden_size]) over the whole slab, default eps = 1e-5.
        mean = jnp.mean(seq, axis=-1, keepdims=True)
        var = jnp.mean(jnp.square(seq - mean), axis=-1, keepdims=True)
        nrm = (seq - mean) * jax.lax.rsqrt(var + 1e-5) * ln_w + ln_b
        # TODO(synk): F.gelu default is the exact erf form; tanh approximation used
        # here because erf has no guaranteed Mosaic lowering (max ~3e-4 deviation).
        c = math.sqrt(2.0 / math.pi)
        act = 0.5 * nrm * (1.0 + jnp.tanh(c * (nrm + 0.044715 * nrm * nrm * nrm)))

        # Single stacked head matmul (all L heads at once); row i of head i is the
        # 128-lane-aligned diagonal block -> static, shuffle-free slices.
        head_cp.wait()
        w_all = linw_vmem[...]                        # (D, L*t_pad)
        big = jnp.dot(act, w_all, preferred_element_type=jnp.float32)  # (L, L*t_pad)
        logits = jnp.concatenate(
            [big[i:i + 1, i * t_pad:(i + 1) * t_pad] for i in range(L)], axis=0)

        # gumbel_sigmoid_sample(logits, T, offset=base): base folded into `gumb`
        # host-side; division by T replaced by a constant multiply.
        out_ref[...] = jax.nn.sigmoid((logits + gumb) * inv_T).astype(out_ref.dtype)

    return kernel


def init_params(key, t_structures, hidden_size=32):
    """Deterministic parameter set mirroring the module's parameter shapes."""
    Hs = hidden_size
    HID = 2 * Hs
    G = 3 * HID
    D = 4 * Hs
    L = len(t_structures)
    ks = jax.random.split(key, 9 + L)
    b = 1.0 / math.sqrt(HID)

    def u(k, shape, bound):
        return jax.random.uniform(k, shape, jnp.float32, minval=-bound, maxval=bound)

    return {
        # nn.Parameter(Tensor(L, 1, Hs)) with normal_ init (batch dim squeezed).
        "inputs": jax.random.normal(ks[0], (L, Hs), jnp.float32),
        # GRU weights, direction-stacked: [forward, reverse]; rows ordered [r|z|n].
        "w_ih": jnp.stack([u(ks[1], (G, Hs), b), u(ks[2], (G, Hs), b)]),
        "w_hh": jnp.stack([u(ks[3], (G, HID), b), u(ks[4], (G, HID), b)]),
        "b_ih": jnp.stack([u(ks[5], (G,), b), u(ks[6], (G,), b)]),
        "b_hh": jnp.stack([u(ks[7], (G,), b), u(ks[8], (G,), b)]),
        "ln_w": jnp.ones((D,), jnp.float32),
        "ln_b": jnp.zeros((D,), jnp.float32),
        "lin_w": [u(ks[9 + i], (t_structures[i], D), 1.0 / math.sqrt(D))
                  for i in range(L)],
    }


def hypernetwork_forward(params, t_structures, noise_key, *, hidden_size=32,
                         T=0.4, base=3.0, training=True):
    """Pallas-backed equivalent of hypernetwork.forward(). Returns a list of 1-D gates."""
    Hs = hidden_size
    HID = 2 * Hs
    D = 4 * Hs
    W = 2 * HID
    L = len(t_structures)
    t_pad = _round_up(max(t_structures), 128)   # lane-dense head width -> unmasked stores

    x = params["inputs"]                                   # (L, Hs)
    # Row s feeds the fused step s: fwd direction sees x[s], bwd direction sees x[L-1-s].
    x2 = jnp.concatenate([x, x[::-1]], axis=1)             # (L, 2*Hs)

    def fuse_gates(w_f_t, w_b_t):
        """w_*_t: (in_dim, 3*HID) pre-transposed per-direction weights, cols = [r|z|n].
        Returns (2*in_dim, 6*HID) with 128-lane-aligned gate slabs [r_f|r_b][z_f|z_b][n_f|n_b];
        rows 0:in_dim are driven by the fwd state/input, rows in_dim:2*in_dim by the bwd one."""
        in_dim = w_f_t.shape[0]
        zero = jnp.zeros((in_dim, HID), jnp.float32)
        top = jnp.concatenate([w_f_t[:, 0:HID], zero,
                               w_f_t[:, HID:2 * HID], zero,
                               w_f_t[:, 2 * HID:3 * HID], zero], axis=1)
        bot = jnp.concatenate([zero, w_b_t[:, 0:HID],
                               zero, w_b_t[:, HID:2 * HID],
                               zero, w_b_t[:, 2 * HID:3 * HID]], axis=1)
        return jnp.concatenate([top, bot], axis=0)

    def fuse_bias(b_f, b_b):
        return jnp.concatenate([b_f[0:HID], b_b[0:HID],
                                b_f[HID:2 * HID], b_b[HID:2 * HID],
                                b_f[2 * HID:3 * HID], b_b[2 * HID:3 * HID]])

    wih_fused = fuse_gates(params["w_ih"][0].T, params["w_ih"][1].T)   # (2*Hs, 3*W)
    whh_fused = fuse_gates(params["w_hh"][0].T, params["w_hh"][1].T)   # (W, 3*W)
    bias_fused = jnp.stack([fuse_bias(params["b_ih"][0], params["b_ih"][1]),
                            fuse_bias(params["b_hh"][0], params["b_hh"][1])])  # (2, 3*W)
    ln = jnp.stack([params["ln_w"], params["ln_b"]])                   # (2, D)

    # All heads stacked side-by-side: transposed, zero-padded to t_pad lanes each.
    linw = jnp.concatenate(
        [jnp.pad(w.T, ((0, 0), (0, t_pad - w.shape[0]))) for w in params["lin_w"]],
        axis=1)                                                        # (D, L*t_pad)

    # sample_gumbel: U ~ [0,1), g = -log(-log(U + eps) + eps); `base` folded in here.
    eps = 1e-20
    u = jax.random.uniform(noise_key, (L, t_pad), jnp.float32)
    gumbel = -jnp.log(-jnp.log(u + eps) + eps) + base

    kernel = _build_kernel(L, Hs, t_pad, T)
    vmem = pl.BlockSpec(memory_space=pltpu.MemorySpace.VMEM)
    out = pl.pallas_call(
        kernel,
        out_shape=jax.ShapeDtypeStruct((L, t_pad), jnp.float32),
        in_specs=[vmem, vmem, vmem, vmem, vmem, vmem,
                  pl.BlockSpec(memory_space=pl.ANY)],     # head weights stay in HBM
        out_specs=vmem,
        scratch_shapes=[pltpu.VMEM((D, L * t_pad), jnp.float32),  # head-weight landing buffer
                        pltpu.SemaphoreType.DMA],
    )(x2, wih_fused, whh_fused, bias_fused, ln, gumbel, linw)

    # Per-structure slices == the module's .squeeze() outputs, shape (t_sp[i],).
    tp_out = [out[i, : t_structures[i]] for i in range(L)]

    if not training:
        soft = tp_out
        hard = [jnp.round(s) for s in soft]                 # hard_sample forward value
        tp_out = [jnp.where(h.sum() == 0, h.at[jnp.argmax(s)].set(1.0), h)
                  for h, s in zip(hard, soft)]
    return tp_out


def hypernetwork_reference(params, t_structures, noise_key, *, hidden_size=32,
                           T=0.4, base=3.0):
    """Pure-JAX reference implementing the same math (training branch, per-direction loops)."""
    Hs = hidden_size
    HID = 2 * Hs
    L = len(t_structures)
    x = params["inputs"]

    def run_direction(d, reverse):
        wih, whh = params["w_ih"][d], params["w_hh"][d]
        bih, bhh = params["b_ih"][d], params["b_hh"][d]
        h = jnp.zeros((HID,), jnp.float32)
        hs = [None] * L
        steps = range(L - 1, -1, -1) if reverse else range(L)
        for t in steps:
            gi = jnp.dot(wih, x[t], precision="highest") + bih
            gh = jnp.dot(whh, h, precision="highest") + bhh
            r = jax.nn.sigmoid(gi[:HID] + gh[:HID])
            z = jax.nn.sigmoid(gi[HID:2 * HID] + gh[HID:2 * HID])
            n = jnp.tanh(gi[2 * HID:] + r * gh[2 * HID:])
            h = (1.0 - z) * n + z * h
            hs[t] = h
        return jnp.stack(hs)

    seq = jnp.concatenate([run_direction(0, False), run_direction(1, True)], axis=1)
    mean = seq.mean(axis=-1, keepdims=True)
    var = jnp.square(seq - mean).mean(axis=-1, keepdims=True)
    nrm = (seq - mean) * jax.lax.rsqrt(var + 1e-5) * params["ln_w"] + params["ln_b"]
    c = math.sqrt(2.0 / math.pi)
    act = 0.5 * nrm * (1.0 + jnp.tanh(c * (nrm + 0.044715 * nrm ** 3)))

    t_pad = _round_up(max(t_structures), 128)
    eps = 1e-20
    u = jax.random.uniform(noise_key, (L, t_pad), jnp.float32)
    gumbel = -jnp.log(-jnp.log(u + eps) + eps)

    outs = []
    for i in range(L):
        logits = jnp.dot(params["lin_w"][i], act[i], precision="highest")
        outs.append(jax.nn.sigmoid((logits + gumbel[i, : t_structures[i]] + base) / T))
    return outs


if __name__ == "__main__":
    key = jax.random.PRNGKey(0)
    t_structures = [16, 24, 48, 8, 64, 32, 16, 40]   # per-layer prunable widths
    hidden_size = 32

    pkey, nkey = jax.random.split(key)
    params = init_params(pkey, t_structures, hidden_size=hidden_size)

    # Training-branch forward (nn.Module default training=True).
    out = hypernetwork_forward(params, t_structures, nkey,
                               hidden_size=hidden_size, training=True)
    out = jax.block_until_ready(out)

    # Also exercise the eval branch (hard_sample + zero-sum fixup) once.
    _ = jax.block_until_ready(
        hypernetwork_forward(params, t_structures, nkey,
                             hidden_size=hidden_size, training=False))

    ref = hypernetwork_reference(params, t_structures, nkey, hidden_size=hidden_size)

    # Loose-ish tolerance: in-kernel MXU f32 matmul pass count can differ from the
    # reference's precision='highest' dots; real bugs produce O(0.1-1) errors.
    ok = all(
        o.shape == r.shape and bool(jnp.allclose(o, r, atol=2e-2, rtol=2e-2))
        for o, r in zip(out, ref)
    )
    if ok:
        print("KERNEL_OK")
</pallas_src>

<mosaic_0001>
module attributes {stable_mosaic.version = 11 : i64} {
  func.func @kernel(%arg0: memref<8x64xf32, #tpu.memory_space<vmem>>, %arg1: memref<64x384xf32, #tpu.memory_space<vmem>>, %arg2: memref<128x384xf32, #tpu.memory_space<vmem>>, %arg3: memref<2x384xf32, #tpu.memory_space<vmem>>, %arg4: memref<2x128xf32, #tpu.memory_space<vmem>>, %arg5: memref<8x128xf32, #tpu.memory_space<vmem>>, %arg6: memref<128x1024xf32, #tpu.memory_space<any>>, %arg7: memref<8x128xf32, #tpu.memory_space<vmem>>, %arg8: memref<128x1024xf32, #tpu.memory_space<vmem>>, %arg9: memref<!tpu.dma_semaphore, #tpu.memory_space<semaphore_mem>>) attributes {dimension_semantics = [], scalar_prefetch = 0 : i64, scratch_operands = 2 : i64, tpu.core_type = #tpu.core_type<tc>} {
    tpu.enqueue_dma source(%arg6 : memref<128x1024xf32, #tpu.memory_space<any>>) target(%arg8 : memref<128x1024xf32, #tpu.memory_space<vmem>>) target_semaphore(%arg9 : memref<!tpu.dma_semaphore, #tpu.memory_space<semaphore_mem>>)
    %c0 = arith.constant 0 : index
    %c0_0 = arith.constant 0 : index
    %0 = vector.load %arg0[%c0, %c0_0] : memref<8x64xf32, #tpu.memory_space<vmem>>, vector<8x64xf32>
    %c0_1 = arith.constant 0 : index
    %c0_2 = arith.constant 0 : index
    %1 = vector.load %arg1[%c0_1, %c0_2] : memref<64x384xf32, #tpu.memory_space<vmem>>, vector<64x384xf32>
    %c0_3 = arith.constant 0 : index
    %c0_4 = arith.constant 0 : index
    %2 = vector.load %arg2[%c0_3, %c0_4] : memref<128x384xf32, #tpu.memory_space<vmem>>, vector<128x384xf32>
    %c0_5 = arith.constant 0 : index
    %c0_6 = arith.constant 0 : index
    %3 = vector.load %arg3[%c0_5, %c0_6] : memref<2x384xf32, #tpu.memory_space<vmem>>, vector<1x384xf32>
    %c1 = arith.constant 1 : index
    %c0_7 = arith.constant 0 : index
    %4 = vector.load %arg3[%c1, %c0_7] : memref<2x384xf32, #tpu.memory_space<vmem>>, vector<1x384xf32>
    %c0_8 = arith.constant 0 : index
    %c0_9 = arith.constant 0 : index
    %5 = vector.load %arg4[%c0_8, %c0_9] : memref<2x128xf32, #tpu.memory_space<vmem>>, vector<1x128xf32>
    %c1_10 = arith.constant 1 : index
    %c0_11 = arith.constant 0 : index
    %6 = vector.load %arg4[%c1_10, %c0_11] : memref<2x128xf32, #tpu.memory_space<vmem>>, vector<1x128xf32>
    %c0_12 = arith.constant 0 : index
    %c0_13 = arith.constant 0 : index
    %7 = vector.load %arg5[%c0_12, %c0_13] : memref<8x128xf32, #tpu.memory_space<vmem>>, vector<8x128xf32>
    %cst = arith.constant dense<0.000000e+00> : vector<8x384xf32>
    %8 = tpu.matmul %0, %1, %cst {dimension_numbers = #tpu.dot_dimension_numbers<[1], [0], [0], [1], [0, 0, 1, 1], [], []>} : vector<8x64xf32>, vector<64x384xf32>, vector<8x384xf32> -> vector<8x384xf32>
    %9 = vector.broadcast %3 : vector<1x384xf32> to vector<8x384xf32>
    %10 = arith.addf %8, %9 : vector<8x384xf32>
    %cst_14 = arith.constant 0.000000e+00 : f32
    %11 = vector.broadcast %cst_14 : f32 to vector<1x128xf32>
    %12 = vector.extract_strided_slice %10 {offsets = [0, 0], sizes = [1, 384], strides = [1, 1]} : vector<8x384xf32> to vector<1x384xf32>
    %cst_15 = arith.constant dense<0.000000e+00> : vector<1x384xf32>
    %13 = tpu.matmul %11, %2, %cst_15 {dimension_numbers = #tpu.dot_dimension_numbers<[1], [0], [0], [1], [0, 0, 1, 1], [], []>} : vector<1x128xf32>, vector<128x384xf32>, vector<1x384xf32> -> vector<1x384xf32>
    %14 = arith.addf %13, %4 : vector<1x384xf32>
    %15 = vector.extract_strided_slice %12 {offsets = [0, 0], sizes = [1, 128], strides = [1, 1]} : vector<1x384xf32> to vector<1x128xf32>
    %16 = vector.extract_strided_slice %14 {offsets = [0, 0], sizes = [1, 128], strides = [1, 1]} : vector<1x384xf32> to vector<1x128xf32>
    %17 = arith.addf %15, %16 : vector<1x128xf32>
    %18 = arith.negf %17 : vector<1x128xf32>
    %19 = math.exp %18 : vector<1x128xf32>
    %cst_16 = arith.constant 1.000000e+00 : f32
    %20 = vector.broadcast %cst_16 : f32 to vector<1x128xf32>
    %21 = arith.addf %20, %19 : vector<1x128xf32>
    %22 = arith.divf %20, %21 : vector<1x128xf32>
    %23 = vector.extract_strided_slice %12 {offsets = [0, 128], sizes = [1, 128], strides = [1, 1]} : vector<1x384xf32> to vector<1x128xf32>
    %24 = vector.extract_strided_slice %14 {offsets = [0, 128], sizes = [1, 128], strides = [1, 1]} : vector<1x384xf32> to vector<1x128xf32>
    %25 = arith.addf %23, %24 : vector<1x128xf32>
    %26 = arith.negf %25 : vector<1x128xf32>
    %27 = math.exp %26 : vector<1x128xf32>
    %cst_17 = arith.constant 1.000000e+00 : f32
    %28 = vector.broadcast %cst_17 : f32 to vector<1x128xf32>
    %29 = arith.addf %28, %27 : vector<1x128xf32>
    %30 = arith.divf %28, %29 : vector<1x128xf32>
    %31 = vector.extract_strided_slice %12 {offsets = [0, 256], sizes = [1, 128], strides = [1, 1]} : vector<1x384xf32> to vector<1x128xf32>
    %32 = vector.extract_strided_slice %14 {offsets = [0, 256], sizes = [1, 128], strides = [1, 1]} : vector<1x384xf32> to vector<1x128xf32>
    %33 = arith.mulf %22, %32 : vector<1x128xf32>
    %34 = arith.addf %31, %33 : vector<1x128xf32>
    %35 = math.tanh %34 : vector<1x128xf32>
    %cst_18 = arith.constant 1.000000e+00 : f32
    %36 = vector.broadcast %cst_18 : f32 to vector<1x128xf32>
    %37 = arith.subf %36, %30 : vector<1x128xf32>
    %38 = arith.mulf %37, %35 : vector<1x128xf32>
    %39 = arith.mulf %30, %11 : vector<1x128xf32>
    %40 = arith.addf %38, %39 : vector<1x128xf32>
    %41 = vector.extract_strided_slice %10 {offsets = [1, 0], sizes = [1, 384], strides = [1, 1]} : vector<8x384xf32> to vector<1x384xf32>
    %cst_19 = arith.constant dense<0.000000e+00> : vector<1x384xf32>
    %42 = tpu.matmul %40, %2, %cst_19 {dimension_numbers = #tpu.dot_dimension_numbers<[1], [0], [0], [1], [0, 0, 1, 1], [], []>} : vector<1x128xf32>, vector<128x384xf32>, vector<1x384xf32> -> vector<1x384xf32>
    %43 = arith.addf %42, %4 : vector<1x384xf32>
    %44 = vector.extract_strided_slice %41 {offsets = [0, 0], sizes = [1, 128], strides = [1, 1]} : vector<1x384xf32> to vector<1x128xf32>
    %45 = vector.extract_strided_slice %43 {offsets = [0, 0], sizes = [1, 128], strides = [1, 1]} : vector<1x384xf32> to vector<1x128xf32>
    %46 = arith.addf %44, %45 : vector<1x128xf32>
    %47 = arith.negf %46 : vector<1x128xf32>
    %48 = math.exp %47 : vector<1x128xf32>
    %cst_20 = arith.constant 1.000000e+00 : f32
    %49 = vector.broadcast %cst_20 : f32 to vector<1x128xf32>
    %50 = arith.addf %49, %48 : vector<1x128xf32>
    %51 = arith.divf %49, %50 : vector<1x128xf32>
    %52 = vector.extract_strided_slice %41 {offsets = [0, 128], sizes = [1, 128], strides = [1, 1]} : vector<1x384xf32> to vector<1x128xf32>
    %53 = vector.extract_strided_slice %43 {offsets = [0, 128], sizes = [1, 128], strides = [1, 1]} : vector<1x384xf32> to vector<1x128xf32>
    %54 = arith.addf %52, %53 : vector<1x128xf32>
    %55 = arith.negf %54 : vector<1x128xf32>
    %56 = math.exp %55 : vector<1x128xf32>
    %cst_21 = arith.constant 1.000000e+00 : f32
    %57 = vector.broadcast %cst_21 : f32 to vector<1x128xf32>
    %58 = arith.addf %57, %56 : vector<1x128xf32>
    %59 = arith.divf %57, %58 : vector<1x128xf32>
    %60 = vector.extract_strided_slice %41 {offsets = [0, 256], sizes = [1, 128], strides = [1, 1]} : vector<1x384xf32> to vector<1x128xf32>
    %61 = vector.extract_strided_slice %43 {offsets = [0, 256], sizes = [1, 128], strides = [1, 1]} : vector<1x384xf32> to vector<1x128xf32>
    %62 = arith.mulf %51, %61 : vector<1x128xf32>
    %63 = arith.addf %60, %62 : vector<1x128xf32>
    %64 = math.tanh %63 : vector<1x128xf32>
    %cst_22 = arith.constant 1.000000e+00 : f32
    %65 = vector.broadcast %cst_22 : f32 to vector<1x128xf32>
    %66 = arith.subf %65, %59 : vector<1x128xf32>
    %67 = arith.mulf %66, %64 : vector<1x128xf32>
    %68 = arith.mulf %59, %40 : vector<1x128xf32>
    %69 = arith.addf %67, %68 : vector<1x128xf32>
    %70 = vector.extract_strided_slice %10 {offsets = [2, 0], sizes = [1, 384], strides = [1, 1]} : vector<8x384xf32> to vector<1x384xf32>
    %cst_23 = arith.constant dense<0.000000e+00> : vector<1x384xf32>
    %71 = tpu.matmul %69, %2, %cst_23 {dimension_numbers = #tpu.dot_dimension_numbers<[1], [0], [0], [1], [0, 0, 1, 1], [], []>} : vector<1x128xf32>, vector<128x384xf32>, vector<1x384xf32> -> vector<1x384xf32>
    %72 = arith.addf %71, %4 : vector<1x384xf32>
    %73 = vector.extract_strided_slice %70 {offsets = [0, 0], sizes = [1, 128], strides = [1, 1]} : vector<1x384xf32> to vector<1x128xf32>
    %74 = vector.extract_strided_slice %72 {offsets = [0, 0], sizes = [1, 128], strides = [1, 1]} : vector<1x384xf32> to vector<1x128xf32>
    %75 = arith.addf %73, %74 : vector<1x128xf32>
    %76 = arith.negf %75 : vector<1x128xf32>
    %77 = math.exp %76 : vector<1x128xf32>
    %cst_24 = arith.constant 1.000000e+00 : f32
    %78 = vector.broadcast %cst_24 : f32 to vector<1x128xf32>
    %79 = arith.addf %78, %77 : vector<1x128xf32>
    %80 = arith.divf %78, %79 : vector<1x128xf32>
    %81 = vector.extract_strided_slice %70 {offsets = [0, 128], sizes = [1, 128], strides = [1, 1]} : vector<1x384xf32> to vector<1x128xf32>
    %82 = vector.extract_strided_slice %72 {offsets = [0, 128], sizes = [1, 128], strides = [1, 1]} : vector<1x384xf32> to vector<1x128xf32>
    %83 = arith.addf %81, %82 : vector<1x128xf32>
    %84 = arith.negf %83 : vector<1x128xf32>
    %85 = math.exp %84 : vector<1x128xf32>
    %cst_25 = arith.constant 1.000000e+00 : f32
    %86 = vector.broadcast %cst_25 : f32 to vector<1x128xf32>
    %87 = arith.addf %86, %85 : vector<1x128xf32>
    %88 = arith.divf %86, %87 : vector<1x128xf32>
    %89 = vector.extract_strided_slice %70 {offsets = [0, 256], sizes = [1, 128], strides = [1, 1]} : vector<1x384xf32> to vector<1x128xf32>
    %90 = vector.extract_strided_slice %72 {offsets = [0, 256], sizes = [1, 128], strides = [1, 1]} : vector<1x384xf32> to vector<1x128xf32>
    %91 = arith.mulf %80, %90 : vector<1x128xf32>
    %92 = arith.addf %89, %91 : vector<1x128xf32>
    %93 = math.tanh %92 : vector<1x128xf32>
    %cst_26 = arith.constant 1.000000e+00 : f32
    %94 = vector.broadcast %cst_26 : f32 to vector<1x128xf32>
    %95 = arith.subf %94, %88 : vector<1x128xf32>
    %96 = arith.mulf %95, %93 : vector<1x128xf32>
    %97 = arith.mulf %88, %69 : vector<1x128xf32>
    %98 = arith.addf %96, %97 : vector<1x128xf32>
    %99 = vector.extract_strided_slice %10 {offsets = [3, 0], sizes = [1, 384], strides = [1, 1]} : vector<8x384xf32> to vector<1x384xf32>
    %cst_27 = arith.constant dense<0.000000e+00> : vector<1x384xf32>
    %100 = tpu.matmul %98, %2, %cst_27 {dimension_numbers = #tpu.dot_dimension_numbers<[1], [0], [0], [1], [0, 0, 1, 1], [], []>} : vector<1x128xf32>, vector<128x384xf32>, vector<1x384xf32> -> vector<1x384xf32>
    %101 = arith.addf %100, %4 : vector<1x384xf32>
    %102 = vector.extract_strided_slice %99 {offsets = [0, 0], sizes = [1, 128], strides = [1, 1]} : vector<1x384xf32> to vector<1x128xf32>
    %103 = vector.extract_strided_slice %101 {offsets = [0, 0], sizes = [1, 128], strides = [1, 1]} : vector<1x384xf32> to vector<1x128xf32>
    %104 = arith.addf %102, %103 : vector<1x128xf32>
    %105 = arith.negf %104 : vector<1x128xf32>
    %106 = math.exp %105 : vector<1x128xf32>
    %cst_28 = arith.constant 1.000000e+00 : f32
    %107 = vector.broadcast %cst_28 : f32 to vector<1x128xf32>
    %108 = arith.addf %107, %106 : vector<1x128xf32>
    %109 = arith.divf %107, %108 : vector<1x128xf32>
    %110 = vector.extract_strided_slice %99 {offsets = [0, 128], sizes = [1, 128], strides = [1, 1]} : vector<1x384xf32> to vector<1x128xf32>
    %111 = vector.extract_strided_slice %101 {offsets = [0, 128], sizes = [1, 128], strides = [1, 1]} : vector<1x384xf32> to vector<1x128xf32>
    %112 = arith.addf %110, %111 : vector<1x128xf32>
    %113 = arith.negf %112 : vector<1x128xf32>
    %114 = math.exp %113 : vector<1x128xf32>
    %cst_29 = arith.constant 1.000000e+00 : f32
    %115 = vector.broadcast %cst_29 : f32 to vector<1x128xf32>
    %116 = arith.addf %115, %114 : vector<1x128xf32>
    %117 = arith.divf %115, %116 : vector<1x128xf32>
    %118 = vector.extract_strided_slice %99 {offsets = [0, 256], sizes = [1, 128], strides = [1, 1]} : vector<1x384xf32> to vector<1x128xf32>
    %119 = vector.extract_strided_slice %101 {offsets = [0, 256], sizes = [1, 128], strides = [1, 1]} : vector<1x384xf32> to vector<1x128xf32>
    %120 = arith.mulf %109, %119 : vector<1x128xf32>
    %121 = arith.addf %118, %120 : vector<1x128xf32>
    %122 = math.tanh %121 : vector<1x128xf32>
    %cst_30 = arith.constant 1.000000e+00 : f32
    %123 = vector.broadcast %cst_30 : f32 to vector<1x128xf32>
    %124 = arith.subf %123, %117 : vector<1x128xf32>
    %125 = arith.mulf %124, %122 : vector<1x128xf32>
    %126 = arith.mulf %117, %98 : vector<1x128xf32>
    %127 = arith.addf %125, %126 : vector<1x128xf32>
    %128 = vector.extract_strided_slice %10 {offsets = [4, 0], sizes = [1, 384], strides = [1, 1]} : vector<8x384xf32> to vector<1x384xf32>
    %cst_31 = arith.constant dense<0.000000e+00> : vector<1x384xf32>
    %129 = tpu.matmul %127, %2, %cst_31 {dimension_numbers = #tpu.dot_dimension_numbers<[1], [0], [0], [1], [0, 0, 1, 1], [], []>} : vector<1x128xf32>, vector<128x384xf32>, vector<1x384xf32> -> vector<1x384xf32>
    %130 = arith.addf %129, %4 : vector<1x384xf32>
    %131 = vector.extract_strided_slice %128 {offsets = [0, 0], sizes = [1, 128], strides = [1, 1]} : vector<1x384xf32> to vector<1x128xf32>
    %132 = vector.extract_strided_slice %130 {offsets = [0, 0], sizes = [1, 128], strides = [1, 1]} : vector<1x384xf32> to vector<1x128xf32>
    %133 = arith.addf %131, %132 : vector<1x128xf32>
    %134 = arith.negf %133 : vector<1x128xf32>
    %135 = math.exp %134 : vector<1x128xf32>
    %cst_32 = arith.constant 1.000000e+00 : f32
    %136 = vector.broadcast %cst_32 : f32 to vector<1x128xf32>
    %137 = arith.addf %136, %135 : vector<1x128xf32>
    %138 = arith.divf %136, %137 : vector<1x128xf32>
    %139 = vector.extract_strided_slice %128 {offsets = [0, 128], sizes = [1, 128], strides = [1, 1]} : vector<1x384xf32> to vector<1x128xf32>
    %140 = vector.extract_strided_slice %130 {offsets = [0, 128], sizes = [1, 128], strides = [1, 1]} : vector<1x384xf32> to vector<1x128xf32>
    %141 = arith.addf %139, %140 : vector<1x128xf32>
    %142 = arith.negf %141 : vector<1x128xf32>
    %143 = math.exp %142 : vector<1x128xf32>
    %cst_33 = arith.constant 1.000000e+00 : f32
    %144 = vector.broadcast %cst_33 : f32 to vector<1x128xf32>
    %145 = arith.addf %144, %143 : vector<1x128xf32>
    %146 = arith.divf %144, %145 : vector<1x128xf32>
    %147 = vector.extract_strided_slice %128 {offsets = [0, 256], sizes = [1, 128], strides = [1, 1]} : vector<1x384xf32> to vector<1x128xf32>
    %148 = vector.extract_strided_slice %130 {offsets = [0, 256], sizes = [1, 128], strides = [1, 1]} : vector<1x384xf32> to vector<1x128xf32>
    %149 = arith.mulf %138, %148 : vector<1x128xf32>
    %150 = arith.addf %147, %149 : vector<1x128xf32>
    %151 = math.tanh %150 : vector<1x128xf32>
    %cst_34 = arith.constant 1.000000e+00 : f32
    %152 = vector.broadcast %cst_34 : f32 to vector<1x128xf32>
    %153 = arith.subf %152, %146 : vector<1x128xf32>
    %154 = arith.mulf %153, %151 : vector<1x128xf32>
    %155 = arith.mulf %146, %127 : vector<1x128xf32>
    %156 = arith.addf %154, %155 : vector<1x128xf32>
    %157 = vector.extract_strided_slice %10 {offsets = [5, 0], sizes = [1, 384], strides = [1, 1]} : vector<8x384xf32> to vector<1x384xf32>
    %cst_35 = arith.constant dense<0.000000e+00> : vector<1x384xf32>
    %158 = tpu.matmul %156, %2, %cst_35 {dimension_numbers = #tpu.dot_dimension_numbers<[1], [0], [0], [1], [0, 0, 1, 1], [], []>} : vector<1x128xf32>, vector<128x384xf32>, vector<1x384xf32> -> vector<1x384xf32>
    %159 = arith.addf %158, %4 : vector<1x384xf32>
    %160 = vector.extract_strided_slice %157 {offsets = [0, 0], sizes = [1, 128], strides = [1, 1]} : vector<1x384xf32> to vector<1x128xf32>
    %161 = vector.extract_strided_slice %159 {offsets = [0, 0], sizes = [1, 128], strides = [1, 1]} : vector<1x384xf32> to vector<1x128xf32>
    %162 = arith.addf %160, %161 : vector<1x128xf32>
    %163 = arith.negf %162 : vector<1x128xf32>
    %164 = math.exp %163 : vector<1x128xf32>
    %cst_36 = arith.constant 1.000000e+00 : f32
    %165 = vector.broadcast %cst_36 : f32 to vector<1x128xf32>
    %166 = arith.addf %165, %164 : vector<1x128xf32>
    %167 = arith.divf %165, %166 : vector<1x128xf32>
    %168 = vector.extract_strided_slice %157 {offsets = [0, 128], sizes = [1, 128], strides = [1, 1]} : vector<1x384xf32> to vector<1x128xf32>
    %169 = vector.extract_strided_slice %159 {offsets = [0, 128], sizes = [1, 128], strides = [1, 1]} : vector<1x384xf32> to vector<1x128xf32>
    %170 = arith.addf %168, %169 : vector<1x128xf32>
    %171 = arith.negf %170 : vector<1x128xf32>
    %172 = math.exp %171 : vector<1x128xf32>
    %cst_37 = arith.constant 1.000000e+00 : f32
    %173 = vector.broadcast %cst_37 : f32 to vector<1x128xf32>
    %174 = arith.addf %173, %172 : vector<1x128xf32>
    %175 = arith.divf %173, %174 : vector<1x128xf32>
    %176 = vector.extract_strided_slice %157 {offsets = [0, 256], sizes = [1, 128], strides = [1, 1]} : vector<1x384xf32> to vector<1x128xf32>
    %177 = vector.extract_strided_slice %159 {offsets = [0, 256], sizes = [1, 128], strides = [1, 1]} : vector<1x384xf32> to vector<1x128xf32>
    %178 = arith.mulf %167, %177 : vector<1x128xf32>
    %179 = arith.addf %176, %178 : vector<1x128xf32>
    %180 = math.tanh %179 : vector<1x128xf32>
    %cst_38 = arith.constant 1.000000e+00 : f32
    %181 = vector.broadcast %cst_38 : f32 to vector<1x128xf32>
    %182 = arith.subf %181, %175 : vector<1x128xf32>
    %183 = arith.mulf %182, %180 : vector<1x128xf32>
    %184 = arith.mulf %175, %156 : vector<1x128xf32>
    %185 = arith.addf %183, %184 : vector<1x128xf32>
    %186 = vector.extract_strided_slice %10 {offsets = [6, 0], sizes = [1, 384], strides = [1, 1]} : vector<8x384xf32> to vector<1x384xf32>
    %cst_39 = arith.constant dense<0.000000e+00> : vector<1x384xf32>
    %187 = tpu.matmul %185, %2, %cst_39 {dimension_numbers = #tpu.dot_dimension_numbers<[1], [0], [0], [1], [0, 0, 1, 1], [], []>} : vector<1x128xf32>, vector<128x384xf32>, vector<1x384xf32> -> vector<1x384xf32>
    %188 = arith.addf %187, %4 : vector<1x384xf32>
    %189 = vector.extract_strided_slice %186 {offsets = [0, 0], sizes = [1, 128], strides = [1, 1]} : vector<1x384xf32> to vector<1x128xf32>
    %190 = vector.extract_strided_slice %188 {offsets = [0, 0], sizes = [1, 128], strides = [1, 1]} : vector<1x384xf32> to vector<1x128xf32>
    %191 = arith.addf %189, %190 : vector<1x128xf32>
    %192 = arith.negf %191 : vector<1x128xf32>
    %193 = math.exp %192 : vector<1x128xf32>
    %cst_40 = arith.constant 1.000000e+00 : f32
    %194 = vector.broadcast %cst_40 : f32 to vector<1x128xf32>
    %195 = arith.addf %194, %193 : vector<1x128xf32>
    %196 = arith.divf %194, %195 : vector<1x128xf32>
    %197 = vector.extract_strided_slice %186 {offsets = [0, 128], sizes = [1, 128], strides = [1, 1]} : vector<1x384xf32> to vector<1x128xf32>
    %198 = vector.extract_strided_slice %188 {offsets = [0, 128], sizes = [1, 128], strides = [1, 1]} : vector<1x384xf32> to vector<1x128xf32>
    %199 = arith.addf %197, %198 : vector<1x128xf32>
    %200 = arith.negf %199 : vector<1x128xf32>
    %201 = math.exp %200 : vector<1x128xf32>
    %cst_41 = arith.constant 1.000000e+00 : f32
    %202 = vector.broadcast %cst_41 : f32 to vector<1x128xf32>
    %203 = arith.addf %202, %201 : vector<1x128xf32>
    %204 = arith.divf %202, %203 : vector<1x128xf32>
    %205 = vector.extract_strided_slice %186 {offsets = [0, 256], sizes = [1, 128], strides = [1, 1]} : vector<1x384xf32> to vector<1x128xf32>
    %206 = vector.extract_strided_slice %188 {offsets = [0, 256], sizes = [1, 128], strides = [1, 1]} : vector<1x384xf32> to vector<1x128xf32>
    %207 = arith.mulf %196, %206 : vector<1x128xf32>
    %208 = arith.addf %205, %207 : vector<1x128xf32>
    %209 = math.tanh %208 : vector<1x128xf32>
    %cst_42 = arith.constant 1.000000e+00 : f32
    %210 = vector.broadcast %cst_42 : f32 to vector<1x128xf32>
    %211 = arith.subf %210, %204 : vector<1x128xf32>
    %212 = arith.mulf %211, %209 : vector<1x128xf32>
    %213 = arith.mulf %204, %185 : vector<1x128xf32>
    %214 = arith.addf %212, %213 : vector<1x128xf32>
    %215 = vector.extract_strided_slice %10 {offsets = [7, 0], sizes = [1, 384], strides = [1, 1]} : vector<8x384xf32> to vector<1x384xf32>
    %cst_43 = arith.constant dense<0.000000e+00> : vector<1x384xf32>
    %216 = tpu.matmul %214, %2, %cst_43 {dimension_numbers = #tpu.dot_dimension_numbers<[1], [0], [0], [1], [0, 0, 1, 1], [], []>} : vector<1x128xf32>, vector<128x384xf32>, vector<1x384xf32> -> vector<1x384xf32>
    %217 = arith.addf %216, %4 : vector<1x384xf32>
    %218 = vector.extract_strided_slice %215 {offsets = [0, 0], sizes = [1, 128], strides = [1, 1]} : vector<1x384xf32> to vector<1x128xf32>
    %219 = vector.extract_strided_slice %217 {offsets = [0, 0], sizes = [1, 128], strides = [1, 1]} : vector<1x384xf32> to vector<1x128xf32>
    %220 = arith.addf %218, %219 : vector<1x128xf32>
    %221 = arith.negf %220 : vector<1x128xf32>
    %222 = math.exp %221 : vector<1x128xf32>
    %cst_44 = arith.constant 1.000000e+00 : f32
    %223 = vector.broadcast %cst_44 : f32 to vector<1x128xf32>
    %224 = arith.addf %223, %222 : vector<1x128xf32>
    %225 = arith.divf %223, %224 : vector<1x128xf32>
    %226 = vector.extract_strided_slice %215 {offsets = [0, 128], sizes = [1, 128], strides = [1, 1]} : vector<1x384xf32> to vector<1x128xf32>
    %227 = vector.extract_strided_slice %217 {offsets = [0, 128], sizes = [1, 128], strides = [1, 1]} : vector<1x384xf32> to vector<1x128xf32>
    %228 = arith.addf %226, %227 : vector<1x128xf32>
    %229 = arith.negf %228 : vector<1x128xf32>
    %230 = math.exp %229 : vector<1x128xf32>
    %cst_45 = arith.constant 1.000000e+00 : f32
    %231 = vector.broadcast %cst_45 : f32 to vector<1x128xf32>
    %232 = arith.addf %231, %230 : vector<1x128xf32>
    %233 = arith.divf %231, %232 : vector<1x128xf32>
    %234 = vector.extract_strided_slice %215 {offsets = [0, 256], sizes = [1, 128], strides = [1, 1]} : vector<1x384xf32> to vector<1x128xf32>
    %235 = vector.extract_strided_slice %217 {offsets = [0, 256], sizes = [1, 128], strides = [1, 1]} : vector<1x384xf32> to vector<1x128xf32>
    %236 = arith.mulf %225, %235 : vector<1x128xf32>
    %237 = arith.addf %234, %236 : vector<1x128xf32>
    %238 = math.tanh %237 : vector<1x128xf32>
    %cst_46 = arith.constant 1.000000e+00 : f32
    %239 = vector.broadcast %cst_46 : f32 to vector<1x128xf32>
    %240 = arith.subf %239, %233 : vector<1x128xf32>
    %241 = arith.mulf %240, %238 : vector<1x128xf32>
    %242 = arith.mulf %233, %214 : vector<1x128xf32>
    %243 = arith.addf %241, %242 : vector<1x128xf32>
    %244 = tpu.concatenate %40, %69, %98, %127, %156, %185, %214, %243 in 0 : vector<1x128xf32>, vector<1x128xf32>, vector<1x128xf32>, vector<1x128xf32>, vector<1x128xf32>, vector<1x128xf32>, vector<1x128xf32>, vector<1x128xf32> -> vector<8x128xf32>
    %245 = tpu.concatenate %243, %214, %185, %156, %127, %98, %69, %40 in 0 : vector<1x128xf32>, vector<1x128xf32>, vector<1x128xf32>, vector<1x128xf32>, vector<1x128xf32>, vector<1x128xf32>, vector<1x128xf32>, vector<1x128xf32> -> vector<8x128xf32>
    %246 = vector.extract_strided_slice %244 {offsets = [0, 0], sizes = [8, 64], strides = [1, 1]} : vector<8x128xf32> to vector<8x64xf32>
    %247 = vector.extract_strided_slice %245 {offsets = [0, 64], sizes = [8, 64], strides = [1, 1]} : vector<8x128xf32> to vector<8x64xf32>
    %248 = tpu.concatenate %246, %247 in 1 : vector<8x64xf32>, vector<8x64xf32> -> vector<8x128xf32>
    %cst_47 = arith.constant dense<0.000000e+00> : vector<8xf32>
    %249 = vector.multi_reduction <add>, %248, %cst_47 [1] : vector<8x128xf32> to vector<8xf32>
    %250 = vector.shape_cast %249 : vector<8xf32> to vector<8x1xf32>
    %cst_48 = arith.constant 1.280000e+02 : f32
    %251 = vector.broadcast %cst_48 : f32 to vector<8x1xf32>
    %252 = arith.divf %250, %251 : vector<8x1xf32>
    %253 = vector.broadcast %252 : vector<8x1xf32> to vector<8x128xf32>
    %254 = arith.subf %248, %253 : vector<8x128xf32>
    %255 = arith.mulf %254, %254 : vector<8x128xf32>
    %cst_49 = arith.constant dense<0.000000e+00> : vector<8xf32>
    %256 = vector.multi_reduction <add>, %255, %cst_49 [1] : vector<8x128xf32> to vector<8xf32>
    %257 = vector.shape_cast %256 : vector<8xf32> to vector<8x1xf32>
    %cst_50 = arith.constant 1.280000e+02 : f32
    %258 = vector.broadcast %cst_50 : f32 to vector<8x1xf32>
    %259 = arith.divf %257, %258 : vector<8x1xf32>
    %260 = vector.broadcast %252 : vector<8x1xf32> to vector<8x128xf32>
    %261 = arith.subf %248, %260 : vector<8x128xf32>
    %cst_51 = arith.constant 9.99999974E-6 : f32
    %262 = vector.broadcast %cst_51 : f32 to vector<8x1xf32>
    %263 = arith.addf %259, %262 : vector<8x1xf32>
    %264 = math.rsqrt %263 : vector<8x1xf32>
    %265 = vector.broadcast %264 : vector<8x1xf32> to vector<8x128xf32>
    %266 = arith.mulf %261, %265 : vector<8x128xf32>
    %267 = vector.broadcast %5 : vector<1x128xf32> to vector<8x128xf32>
    %268 = arith.mulf %266, %267 : vector<8x128xf32>
    %269 = vector.broadcast %6 : vector<1x128xf32> to vector<8x128xf32>
    %270 = arith.addf %268, %269 : vector<8x128xf32>
    %cst_52 = arith.constant 5.000000e-01 : f32
    %271 = vector.broadcast %cst_52 : f32 to vector<8x128xf32>
    %272 = arith.mulf %271, %270 : vector<8x128xf32>
    %cst_53 = arith.constant 4.471500e-02 : f32
    %273 = vector.broadcast %cst_53 : f32 to vector<8x128xf32>
    %274 = arith.mulf %273, %270 : vector<8x128xf32>
    %275 = arith.mulf %274, %270 : vector<8x128xf32>
    %276 = arith.mulf %275, %270 : vector<8x128xf32>
    %277 = arith.addf %270, %276 : vector<8x128xf32>
    %cst_54 = arith.constant 0.797884583 : f32
    %278 = vector.broadcast %cst_54 : f32 to vector<8x128xf32>
    %279 = arith.mulf %278, %277 : vector<8x128xf32>
    %280 = math.tanh %279 : vector<8x128xf32>
    %cst_55 = arith.constant 1.000000e+00 : f32
    %281 = vector.broadcast %cst_55 : f32 to vector<8x128xf32>
    %282 = arith.addf %281, %280 : vector<8x128xf32>
    %283 = arith.mulf %272, %282 : vector<8x128xf32>
    tpu.wait_dma2 semaphore(%arg9 : memref<!tpu.dma_semaphore, #tpu.memory_space<semaphore_mem>>) src(%arg6 : memref<128x1024xf32, #tpu.memory_space<any>>) dst(%arg8 : memref<128x1024xf32, #tpu.memory_space<vmem>>)
    %c0_56 = arith.constant 0 : index
    %c0_57 = arith.constant 0 : index
    %284 = vector.load %arg8[%c0_56, %c0_57] : memref<128x1024xf32, #tpu.memory_space<vmem>>, vector<128x1024xf32>
    %cst_58 = arith.constant dense<0.000000e+00> : vector<8x1024xf32>
    %285 = tpu.matmul %283, %284, %cst_58 {dimension_numbers = #tpu.dot_dimension_numbers<[1], [0], [0], [1], [0, 0, 1, 1], [], []>} : vector<8x128xf32>, vector<128x1024xf32>, vector<8x1024xf32> -> vector<8x1024xf32>
    %286 = vector.extract_strided_slice %285 {offsets = [0, 0], sizes = [1, 128], strides = [1, 1]} : vector<8x1024xf32> to vector<1x128xf32>
    %287 = vector.extract_strided_slice %285 {offsets = [1, 128], sizes = [1, 128], strides = [1, 1]} : vector<8x1024xf32> to vector<1x128xf32>
    %288 = vector.extract_strided_slice %285 {offsets = [2, 256], sizes = [1, 128], strides = [1, 1]} : vector<8x1024xf32> to vector<1x128xf32>
    %289 = vector.extract_strided_slice %285 {offsets = [3, 384], sizes = [1, 128], strides = [1, 1]} : vector<8x1024xf32> to vector<1x128xf32>
    %290 = vector.extract_strided_slice %285 {offsets = [4, 512], sizes = [1, 128], strides = [1, 1]} : vector<8x1024xf32> to vector<1x128xf32>
    %291 = vector.extract_strided_slice %285 {offsets = [5, 640], sizes = [1, 128], strides = [1, 1]} : vector<8x1024xf32> to vector<1x128xf32>
    %292 = vector.extract_strided_slice %285 {offsets = [6, 768], sizes = [1, 128], strides = [1, 1]} : vector<8x1024xf32> to vector<1x128xf32>
    %293 = vector.extract_strided_slice %285 {offsets = [7, 896], sizes = [1, 128], strides = [1, 1]} : vector<8x1024xf32> to vector<1x128xf32>
    %294 = tpu.concatenate %286, %287, %288, %289, %290, %291, %292, %293 in 0 : vector<1x128xf32>, vector<1x128xf32>, vector<1x128xf32>, vector<1x128xf32>, vector<1x128xf32>, vector<1x128xf32>, vector<1x128xf32>, vector<1x128xf32> -> vector<8x128xf32>
    %295 = arith.addf %294, %7 : vector<8x128xf32>
    %cst_59 = arith.constant 2.500000e+00 : f32
    %296 = vector.broadcast %cst_59 : f32 to vector<8x128xf32>
    %297 = arith.mulf %295, %296 : vector<8x128xf32>
    %298 = arith.negf %297 : vector<8x128xf32>
    %299 = math.exp %298 : vector<8x128xf32>
    %cst_60 = arith.constant 1.000000e+00 : f32
    %300 = vector.broadcast %cst_60 : f32 to vector<8x128xf32>
    %301 = arith.addf %300, %299 : vector<8x128xf32>
    %302 = arith.divf %300, %301 : vector<8x128xf32>
    %c0_61 = arith.constant 0 : index
    %c0_62 = arith.constant 0 : index
    %303 = vector.load %arg7[%c0_61, %c0_62] : memref<8x128xf32, #tpu.memory_space<vmem>>, vector<8x128xf32>
    tpu.vector_store %arg7[%c0_61, %c0_62], %302 {strides = array<i32>} : memref<8x128xf32, #tpu.memory_space<vmem>>, vector<8x128xf32>,
    return
  }
}

</mosaic_0001>

<llo_original>
// kernel: tpu_custom_call.1
$region0: #{tpu_custom_call.1}
  #allocation0 [shape = 'u32[]', space=smem, size = 0x4, offset = 0x4, fixed_abs, tag = 'smem constant byte address 0x4 - core index']
  #allocation1 [shape = 'u32[72,128]{1,0:T(1,128)}', space=vmem, size = 0x9000, scoped, tag = 'internal scratch']
  #allocation2 [shape = 'f32[128,1024]{1,0:T(8,128)}', space=vmem, size = 0x80000, scoped, tag = 'scratch operand']
  #allocation3 [shape = 's32[1]{0}', space=sflag, size = 0x4, scoped, tag = 'scratch operand']
  #allocation14 [shape = 's32[]', space=sflag, size = 0x4, offset = 0, fixed_abs, tag = 'sflag constant byte address 0x0 - dummy sync flag']
  #allocation15 [shape = 's32[]', space=sflag, size = 0x4, offset = 0, fixed_abs, tag = 'sflag constant byte address 0x0 - dummy sync flag']
  #allocation16 [shape = 'u32[]', space=smem, size = 0x4, offset = 0x44, fixed_abs, tag = 'smem constant byte address 0x44 - assertion arg 0']
  #allocation17 [shape = 'u32[]', space=smem, size = 0x4, offset = 0x48, fixed_abs, tag = 'smem constant byte address 0x48 - assertion arg 1']
  %s0 = inlined_call_operand.hbm [shape: f32[8,64], index: 0, kind: input, shape index: {}]
  %s1 = inlined_call_operand.hbm [shape: f32[64,384], index: 1, kind: input, shape index: {}]
  %s2 = inlined_call_operand.hbm [shape: f32[128,384], index: 2, kind: input, shape index: {}]
  %s3 = inlined_call_operand.hbm [shape: f32[2,384], index: 3, kind: input, shape index: {}]
  %s4 = inlined_call_operand.vmem [shape: f32[2,128], index: 4, kind: input, shape index: {}]
  %s5 = inlined_call_operand.hbm [shape: f32[8,128], index: 5, kind: input, shape index: {}]
  %s6 = inlined_call_operand.hbm [shape: f32[128,1024], index: 6, kind: input, shape index: {}]
  %s7 = inlined_call_operand.hbm [shape: f32[8,128], index: 7, kind: output, shape index: {}]
  %s8 = sld [smem:[#allocation0]]
  $region58: #{tpu_custom_call.1} parent=0
    _
  %s10 = ssub.s32 1, %s8
  %s11 = scalar_select 0, %s10, %s8
  $region1: #{tpu_custom_call.1} parent=0
    #allocation4 [shape = 'u8[4096]{0}', space=vmem, size = 0x1000, scoped, tag = 'input window, operand 0, single buffered']
    #allocation5 [shape = 's32[1]{0}', space=sflag, size = 0x4, scoped, tag = 'scoped memory for tpu_custom_call.1']
    #allocation6 [shape = 's32[1]{0}', space=sflag, size = 0x4, scoped, tag = 'scoped memory for tpu_custom_call.1']
    #allocation7 [shape = 'u8[98304]{0}', space=vmem, size = 0x18000, scoped, tag = 'input window, operand 1, single buffered']
    #allocation8 [shape = 's32[1]{0}', space=sflag, size = 0x4, scoped, tag = 'scoped memory for tpu_custom_call.1']
    #allocation9 [shape = 'u8[196608]{0}', space=vmem, size = 0x30000, scoped, tag = 'input window, operand 2, single buffered']
    #allocation10 [shape = 'u8[3072]{0}', space=vmem, size = 0xc00, scoped, tag = 'input window, operand 3, single buffered']
    #allocation11 [shape = 's32[1]{0}', space=sflag, size = 0x4, scoped, tag = 'scoped memory for tpu_custom_call.1']
    #allocation12 [shape = 'u8[4096]{0}', space=vmem, size = 0x1000, scoped, tag = 'input window, operand 5, single buffered']
    #allocation13 [shape = 'u8[4096]{0}', space=vmem, size = 0x1000, scoped, tag = 'output window, operand 0, single buffered']
    %12 = vsyncpa [#allocation5], 0
    %13 = vsyncpa [#allocation8], 0
    %14 = vsyncpa [#allocation11], 0
    %15 = vsyncpa [#allocation6], 0
    // Predicated region
    $region2: #{tpu_custom_call.1} parent=1 // pred_check
      _
    $region3: #{tpu_custom_call.1} parent=1 // pred_check_branch
      %17 = sbr.rel (0) target = $region5
    $region4: #{tpu_custom_call.1} parent=1 // pred_region
      %19 = vsyncadd [#allocation5], 0
      %s21 = sshll.u32 %s0, 4
      %s22 = int_to_ptr.hbm [resolvable:$true] %s21
      %s23 = sshll.u32 [#allocation4], 4
      %s24 = int_to_ptr.vmem [resolvable:$true] %s23
      %26 = dma.hbm_to_vmem [thread:$0]  %s22, 128, %s24, [#allocation5]
    $region5: #{tpu_custom_call.1} parent=1 // pred_fallthru
      _
    // Predicated region
    $region6: #{tpu_custom_call.1} parent=1 // pred_check
      _
    $region7: #{tpu_custom_call.1} parent=1 // pred_check_branch
      %28 = sbr.rel (0) target = $region9
    $region8: #{tpu_custom_call.1} parent=1 // pred_region
      %30 = vsyncadd [#allocation8], 0
      %s31 = sshll.u32 %s1, 4
      %s32 = int_to_ptr.hbm [resolvable:$true] %s31
      %s33 = sshll.u32 [#allocation7], 4
      %s34 = int_to_ptr.vmem [resolvable:$true] %s33
      %39 = dma.hbm_to_vmem [thread:$0]  %s32, 3072, %s34, [#allocation8], 384, 384, 24
    $region9: #{tpu_custom_call.1} parent=1 // pred_fallthru
      _
    // Predicated region
    $region10: #{tpu_custom_call.1} parent=1 // pred_check
      _
    $region11: #{tpu_custom_call.1} parent=1 // pred_check_branch
      %41 = sbr.rel (0) target = $region13
    $region12: #{tpu_custom_call.1} parent=1 // pred_region
      %43 = vsyncadd [#allocation8], 0
      %s44 = sshll.u32 %s2, 4
      %s45 = int_to_ptr.hbm [resolvable:$true] %s44
      %s46 = sshll.u32 [#allocation9], 4
      %s47 = int_to_ptr.vmem [resolvable:$true] %s46
      %52 = dma.hbm_to_vmem [thread:$0]  %s45, 6144, %s47, [#allocation8], 384, 384, 24
    $region13: #{tpu_custom_call.1} parent=1 // pred_fallthru
      _
    // Predicated region
    $region14: #{tpu_custom_call.1} parent=1 // pred_check
      _
    $region15: #{tpu_custom_call.1} parent=1 // pred_check_branch
      %54 = sbr.rel (0) target = $region17
    $region16: #{tpu_custom_call.1} parent=1 // pred_region
      %56 = vsyncadd [#allocation11], 0
      %s58 = sshll.u32 %s3, 4
      %s59 = int_to_ptr.hbm [resolvable:$true] %s58
      %s60 = sshll.u32 [#allocation10], 4
      %s61 = int_to_ptr.vmem [resolvable:$true] %s60
      %63 = dma.hbm_to_vmem [thread:$0]  %s59, 96, %s61, [#allocation11]
    $region17: #{tpu_custom_call.1} parent=1 // pred_fallthru
      _
    // Predicated region
    $region18: #{tpu_custom_call.1} parent=1 // pred_check
      _
    $region19: #{tpu_custom_call.1} parent=1 // pred_check_branch
      %65 = sbr.rel (0) target = $region21
    $region20: #{tpu_custom_call.1} parent=1 // pred_region
      _
    $region21: #{tpu_custom_call.1} parent=1 // pred_fallthru
      _
    // Predicated region
    $region22: #{tpu_custom_call.1} parent=1 // pred_check
      _
    $region23: #{tpu_custom_call.1} parent=1 // pred_check_branch
      %67 = sbr.rel (0) target = $region25
    $region24: #{tpu_custom_call.1} parent=1 // pred_region
      %69 = vsyncadd [#allocation11], 0
      %s71 = sshll.u32 %s5, 4
      %s72 = int_to_ptr.hbm [resolvable:$true] %s71
      %s73 = sshll.u32 [#allocation12], 4
      %s74 = int_to_ptr.vmem [resolvable:$true] %s73
      %76 = dma.hbm_to_vmem [thread:$0]  %s72, 128, %s74, [#allocation11]
    $region25: #{tpu_custom_call.1} parent=1 // pred_fallthru
      _
    // Predicated region
    $region26: #{tpu_custom_call.1} parent=1 // pred_check
      _
    $region27: #{tpu_custom_call.1} parent=1 // pred_check_branch
      %78 = sbr.rel (0) target = $region29
    $region28: #{tpu_custom_call.1} parent=1 // pred_region
      %80 = dma.done [#allocation5], 128
    $region29: #{tpu_custom_call.1} parent=1 // pred_fallthru
      _
    // Predicated region
    $region30: #{tpu_custom_call.1} parent=1 // pred_check
      _
    $region31: #{tpu_custom_call.1} parent=1 // pred_check_branch
      %82 = sbr.rel (0) target = $region33
    $region32: #{tpu_custom_call.1} parent=1 // pred_region
      %84 = dma.done [#allocation8], 3072
    $region33: #{tpu_custom_call.1} parent=1 // pred_fallthru
      _
    // Predicated region
    $region34: #{tpu_custom_call.1} parent=1 // pred_check
      _
    $region35: #{tpu_custom_call.1} parent=1 // pred_check_branch
      %86 = sbr.rel (0) target = $region37
    $region36: #{tpu_custom_call.1} parent=1 // pred_region
      %88 = dma.done [#allocation8], 6144
    $region37: #{tpu_custom_call.1} parent=1 // pred_fallthru
      _
    // Predicated region
    $region38: #{tpu_custom_call.1} parent=1 // pred_check
      _
    $region39: #{tpu_custom_call.1} parent=1 // pred_check_branch
      %90 = sbr.rel (0) target = $region41
    $region40: #{tpu_custom_call.1} parent=1 // pred_region
      %92 = dma.done [#allocation11], 96
    $region41: #{tpu_custom_call.1} parent=1 // pred_fallthru
      _
    // Predicated region
    $region42: #{tpu_custom_call.1} parent=1 // pred_check
      _
    $region43: #{tpu_custom_call.1} parent=1 // pred_check_branch
      %94 = sbr.rel (0) target = $region45
    $region44: #{tpu_custom_call.1} parent=1 // pred_region
      %96 = dma.done [#allocation11], 128
    $region45: #{tpu_custom_call.1} parent=1 // pred_fallthru
      _
    // Predicated region
    $region46: #{tpu_custom_call.1} parent=1 // pred_check
      _
    $region47: #{tpu_custom_call.1} parent=1 // pred_check_branch
      %98 = sbr.rel target = $region49
    $region48: #{tpu_custom_call.1} parent=1 // pred_region
      %99 = sst [smem:[#allocation16]] [#allocation15]
      %100 = sst [smem:[#allocation17]] [#allocation14]
    $region49: #{tpu_custom_call.1} parent=1 // pred_fallthru
      _
    %102 = shalt.err (0)
    %s104 = sshll.u32 %s6, 4
    %s105 = int_to_ptr.hbm [resolvable:$true] %s104
    %s106 = sshll.u32 [#allocation2], 4
    %s107 = int_to_ptr.vmem [resolvable:$true] %s106
    %109 = dma.hbm_to_vmem [thread:$0]  %s105, 16384, %s107, [#allocation3]
    %v110 = vld [vmem:[#allocation4] sm:$0xff]
    %v111 = vld [vmem:[#allocation7] sm:$0xff]
    %v112 = vld [vmem:[#allocation7 + $0x8] sm:$0xff]
    %v113 = vld [vmem:[#allocation7 + $0x10] sm:$0xff]
    %v114 = vld [vmem:[#allocation7 + $0x18] sm:$0xff]
    %v115 = vld [vmem:[#allocation7 + $0x20] sm:$0xff]
    %v116 = vld [vmem:[#allocation7 + $0x28] sm:$0xff]
    %v117 = vld [vmem:[#allocation7 + $0x30] sm:$0xff]
    %v118 = vld [vmem:[#allocation7 + $0x38] sm:$0xff]
    %v119 = vld [vmem:[#allocation7 + $0x40] sm:$0xff]
    %v120 = vld [vmem:[#allocation7 + $0x48] sm:$0xff]
    %v121 = vld [vmem:[#allocation7 + $0x50] sm:$0xff]
    %v122 = vld [vmem:[#allocation7 + $0x58] sm:$0xff]
    %v123 = vld [vmem:[#allocation7 + $0x60] sm:$0xff]
    %v124 = vld [vmem:[#allocation7 + $0x68] sm:$0xff]
    %v125 = vld [vmem:[#allocation7 + $0x70] sm:$0xff]
    %v126 = vld [vmem:[#allocation7 + $0x78] sm:$0xff]
    %v127 = vld [vmem:[#allocation7 + $0x80] sm:$0xff]
    %v128 = vld [vmem:[#allocation7 + $0x88] sm:$0xff]
    %v129 = vld [vmem:[#allocation7 + $0x90] sm:$0xff]
    %v130 = vld [vmem:[#allocation7 + $0x98] sm:$0xff]
    %v131 = vld [vmem:[#allocation7 + $0xa0] sm:$0xff]
    %v132 = vld [vmem:[#allocation7 + $0xa8] sm:$0xff]
    %v133 = vld [vmem:[#allocation7 + $0xb0] sm:$0xff]
    %v134 = vld [vmem:[#allocation7 + $0xb8] sm:$0xff]
    %v135 = vld [vmem:[#allocation9] sm:$0xff]
    %v136 = vld [vmem:[#allocation9 + $0x8] sm:$0xff]
    %v137 = vld [vmem:[#allocation9 + $0x10] sm:$0xff]
    %v138 = vld [vmem:[#allocation9 + $0x18] sm:$0xff]
    %v139 = vld [vmem:[#allocation9 + $0x20] sm:$0xff]
    %v140 = vld [vmem:[#allocation9 + $0x28] sm:$0xff]
    %v141 = vld [vmem:[#allocation9 + $0x30] sm:$0xff]
    %v142 = vld [vmem:[#allocation9 + $0x38] sm:$0xff]
    %v143 = vld [vmem:[#allocation9 + $0x40] sm:$0xff]
    %v144 = vld [vmem:[#allocation9 + $0x48] sm:$0xff]
    %v145 = vld [vmem:[#allocation9 + $0x50] sm:$0xff]
    %v146 = vld [vmem:[#allocation9 + $0x58] sm:$0xff]
    %v147 = vld [vmem:[#allocation9 + $0x60] sm:$0xff]
    %v148 = vld [vmem:[#allocation9 + $0x68] sm:$0xff]
    %v149 = vld [vmem:[#allocation9 + $0x70] sm:$0xff]
    %v150 = vld [vmem:[#allocation9 + $0x78] sm:$0xff]
    %v151 = vld [vmem:[#allocation9 + $0x80] sm:$0xff]
    %v152 = vld [vmem:[#allocation9 + $0x88] sm:$0xff]
    %v153 = vld [vmem:[#allocation9 + $0x90] sm:$0xff]
    %v154 = vld [vmem:[#allocation9 + $0x98] sm:$0xff]
    %v155 = vld [vmem:[#allocation9 + $0xa0] sm:$0xff]
    %v156 = vld [vmem:[#allocation9 + $0xa8] sm:$0xff]
    %v157 = vld [vmem:[#allocation9 + $0xb0] sm:$0xff]
    %v158 = vld [vmem:[#allocation9 + $0xb8] sm:$0xff]
    %v159 = vld [vmem:[#allocation9 + $0xc0] sm:$0xff]
    %v160 = vld [vmem:[#allocation9 + $0xc8] sm:$0xff]
    %v161 = vld [vmem:[#allocation9 + $0xd0] sm:$0xff]
    %v162 = vld [vmem:[#allocation9 + $0xd8] sm:$0xff]
    %v163 = vld [vmem:[#allocation9 + $0xe0] sm:$0xff]
    %v164 = vld [vmem:[#allocation9 + $0xe8] sm:$0xff]
    %v165 = vld [vmem:[#allocation9 + $0xf0] sm:$0xff]
    %v166 = vld [vmem:[#allocation9 + $0xf8] sm:$0xff]
    %v167 = vld [vmem:[#allocation9 + $0x100] sm:$0xff]
    %v168 = vld [vmem:[#allocation9 + $0x108] sm:$0xff]
    %v169 = vld [vmem:[#allocation9 + $0x110] sm:$0xff]
    %v170 = vld [vmem:[#allocation9 + $0x118] sm:$0xff]
    %v171 = vld [vmem:[#allocation9 + $0x120] sm:$0xff]
    %v172 = vld [vmem:[#allocation9 + $0x128] sm:$0xff]
    %v173 = vld [vmem:[#allocation9 + $0x130] sm:$0xff]
    %v174 = vld [vmem:[#allocation9 + $0x138] sm:$0xff]
    %v175 = vld [vmem:[#allocation9 + $0x140] sm:$0xff]
    %v176 = vld [vmem:[#allocation9 + $0x148] sm:$0xff]
    %v177 = vld [vmem:[#allocation9 + $0x150] sm:$0xff]
    %v178 = vld [vmem:[#allocation9 + $0x158] sm:$0xff]
    %v179 = vld [vmem:[#allocation9 + $0x160] sm:$0xff]
    %v180 = vld [vmem:[#allocation9 + $0x168] sm:$0xff]
    %v181 = vld [vmem:[#allocation9 + $0x170] sm:$0xff]
    %v182 = vld [vmem:[#allocation9 + $0x178] sm:$0xff]
    %v183 = vld [vmem:[#allocation10] ss:$2 sm:$0x7]
    %s184 = scalar_lea.vmem [#allocation10], 1
    %v185 = vld [vmem:[%s184] ss:$2 sm:$0x7]
    %v186 = vld [vmem:[%s4] sm:$0x1]
    %v187 = vld [vmem:[%s4 + $0x1] sm:$0x1]
    %v188 = vld [vmem:[#allocation12] sm:$0xff]
    %v190 = vperm.slane %v183, 0
    %v191 = vperm.slane %v183, 1
    %v192 = vperm.slane %v183, 2
    %vm196 = vcmask 523264
    %v198 = vsel %vm196, %v110, 0
    %200 = vmatpush.msra.mxu0 0.0
    %201 = vmatpush.msra.mxu0 0.0
    %202 = vmatpush.msra.mxu0 0.0
    %203 = vmatpush.msra.mxu0 0.0
    %204 = vmatpush.msra.mxu0 0.0
    %205 = vmatpush.msra.mxu0 0.0
    %206 = vmatpush.msra.mxu0 0.0
    %207 = vmatpush.msra.mxu0 0.0
    %208 = vmatpush.msra.mxu0 %v132
    %209 = vmatpush.msra.mxu0 %v129
    %210 = vmatpush.msra.mxu0 %v126
    %211 = vmatpush.msra.mxu0 %v123
    %212 = vmatpush.msra.mxu0 %v120
    %213 = vmatpush.msra.mxu0 %v117
    %214 = vmatpush.msra.mxu0 %v114
    %215 = vmatpush.msra.mxu0 %v111
    %216 = vmatmul.f32.gmra.mxu0 %v198
    %v217 = vpop.f32.mrf.mxu0
    %v218 = vadd.f32 %v190, %v217
    %219 = vdwg.mxu0
    %220 = vmatpush.msra.mxu0 0.0
    %221 = vmatpush.msra.mxu0 0.0
    %222 = vmatpush.msra.mxu0 0.0
    %223 = vmatpush.msra.mxu0 0.0
    %224 = vmatpush.msra.mxu0 0.0
    %225 = vmatpush.msra.mxu0 0.0
    %226 = vmatpush.msra.mxu0 0.0
    %227 = vmatpush.msra.mxu0 0.0
    %228 = vmatpush.msra.mxu0 %v133
    %229 = vmatpush.msra.mxu0 %v130
    %230 = vmatpush.msra.mxu0 %v127
    %231 = vmatpush.msra.mxu0 %v124
    %232 = vmatpush.msra.mxu0 %v121
    %233 = vmatpush.msra.mxu0 %v118
    %234 = vmatpush.msra.mxu0 %v115
    %235 = vmatpush.msra.mxu0 %v112
    %236 = vmatmul.f32.gmra.mxu0 %v198
    %v237 = vpop.f32.mrf.mxu0
    %v238 = vadd.f32 %v191, %v237
    %239 = vdwg.mxu0
    %240 = vmatpush.msra.mxu0 0.0
    %241 = vmatpush.msra.mxu0 0.0
    %242 = vmatpush.msra.mxu0 0.0
    %243 = vmatpush.msra.mxu0 0.0
    %244 = vmatpush.msra.mxu0 0.0
    %245 = vmatpush.msra.mxu0 0.0
    %246 = vmatpush.msra.mxu0 0.0
    %247 = vmatpush.msra.mxu0 0.0
    %248 = vmatpush.msra.mxu0 %v134
    %249 = vmatpush.msra.mxu0 %v131
    %250 = vmatpush.msra.mxu0 %v128
    %251 = vmatpush.msra.mxu0 %v125
    %252 = vmatpush.msra.mxu0 %v122
    %253 = vmatpush.msra.mxu0 %v119
    %254 = vmatpush.msra.mxu0 %v116
    %255 = vmatpush.msra.mxu0 %v113
    %256 = vmatmul.f32.gmra.mxu0 %v198
    %v257 = vpop.f32.mrf.mxu0
    %v258 = vadd.f32 %v192, %v257
    %259 = vdwg.mxu0
    %v261 = vperm.slane %v185, 0
    %v262 = vperm.slane %v185, 1
    %v263 = vperm.slane %v185, 2
    %267 = vmatpush.msra.mxu0 %v180
    %268 = vmatpush.msra.mxu0 %v177
    %269 = vmatpush.msra.mxu0 %v174
    %270 = vmatpush.msra.mxu0 %v171
    %271 = vmatpush.msra.mxu0 %v168
    %272 = vmatpush.msra.mxu0 %v165
    %273 = vmatpush.msra.mxu0 %v162
    %274 = vmatpush.msra.mxu0 %v159
    %275 = vmatpush.msra.mxu0 %v156
    %276 = vmatpush.msra.mxu0 %v153
    %277 = vmatpush.msra.mxu0 %v150
    %278 = vmatpush.msra.mxu0 %v147
    %279 = vmatpush.msra.mxu0 %v144
    %280 = vmatpush.msra.mxu0 %v141
    %281 = vmatpush.msra.mxu0 %v138
    %282 = vmatpush.msra.mxu0 %v135
    %283 = vmatmul.f32.gmra.mxu0 0.0
    %v284 = vpop.f32.mrf.mxu0
    %v285 = vadd.f32 %v261, %v284
    %286 = vdwg.mxu0
    %287 = vmatpush.msra.mxu0 %v181
    %288 = vmatpush.msra.mxu0 %v178
    %289 = vmatpush.msra.mxu0 %v175
    %290 = vmatpush.msra.mxu0 %v172
    %291 = vmatpush.msra.mxu0 %v169
    %292 = vmatpush.msra.mxu0 %v166
    %293 = vmatpush.msra.mxu0 %v163
    %294 = vmatpush.msra.mxu0 %v160
    %295 = vmatpush.msra.mxu0 %v157
    %296 = vmatpush.msra.mxu0 %v154
    %297 = vmatpush.msra.mxu0 %v151
    %298 = vmatpush.msra.mxu0 %v148
    %299 = vmatpush.msra.mxu0 %v145
    %300 = vmatpush.msra.mxu0 %v142
    %301 = vmatpush.msra.mxu0 %v139
    %302 = vmatpush.msra.mxu0 %v136
    %303 = vmatmul.f32.gmra.mxu0 0.0
    %v304 = vpop.f32.mrf.mxu0
    %v305 = vadd.f32 %v262, %v304
    %306 = vdwg.mxu0
    %307 = vmatpush.msra.mxu0 %v182
    %308 = vmatpush.msra.mxu0 %v179
    %309 = vmatpush.msra.mxu0 %v176
    %310 = vmatpush.msra.mxu0 %v173
    %311 = vmatpush.msra.mxu0 %v170
    %312 = vmatpush.msra.mxu0 %v167
    %313 = vmatpush.msra.mxu0 %v164
    %314 = vmatpush.msra.mxu0 %v161
    %315 = vmatpush.msra.mxu0 %v158
    %316 = vmatpush.msra.mxu0 %v155
    %317 = vmatpush.msra.mxu0 %v152
    %318 = vmatpush.msra.mxu0 %v149
    %319 = vmatpush.msra.mxu0 %v146
    %320 = vmatpush.msra.mxu0 %v143
    %321 = vmatpush.msra.mxu0 %v140
    %322 = vmatpush.msra.mxu0 %v137
    %323 = vmatmul.f32.gmra.mxu0 0.0
    %v324 = vpop.f32.mrf.mxu0
    %v325 = vadd.f32 %v263, %v324
    %326 = vdwg.mxu0
    %v327 = vadd.f32 %v218, %v285
    %v328 = vxor.u32 %v327, 2147483648
    %v329 = vmul.f32 %v328, 1.442695
    %v330 = vpow.pop %v329
    %v331 = vadd.f32 %v330, 1.0
    %v332 = vrcp.pop %v331
    %v333 = vmul.f32 %v331, %v332
    %v334 = vsub.f32 1.0, %v333
    %v335 = vmul.f32 %v332, %v334
    %v336 = vadd.f32 %v332, %v335
    %vm337 = vweird.f32 %v331
    %vm338 = vweird.f32 %v332
    %vm339 = vmor %vm337, %vm338
    %v340 = vsel %vm339, %v332, %v336
    %v341 = vand.u32 2147483647, %v331
    %vm342 = vcmp.eq.f32.partialorder %v341, 8.507059e+37
    %v343 = vand.u32 %v331, 2147483648
    %v344 = vor.u32 1.1754944e-38, %v343
    %v345 = vsel %vm342, %v344, %v340
    %v346 = vmul.f32 1.0, %v345
    %v347 = vadd.f32 %v238, %v305
    %v348 = vxor.u32 %v347, 2147483648
    %v349 = vmul.f32 %v348, 1.442695
    %v350 = vpow.pop %v349
    %v351 = vadd.f32 %v350, 1.0
    %v352 = vrcp.pop %v351
    %v353 = vmul.f32 %v351, %v352
    %v354 = vsub.f32 1.0, %v353
    %v355 = vmul.f32 %v352, %v354
    %v356 = vadd.f32 %v352, %v355
    %vm357 = vweird.f32 %v351
    %vm358 = vweird.f32 %v352
    %vm359 = vmor %vm357, %vm358
    %v360 = vsel %vm359, %v352, %v356
    %v361 = vand.u32 2147483647, %v351
    %vm362 = vcmp.eq.f32.partialorder %v361, 8.507059e+37
    %v363 = vand.u32 %v351, 2147483648
    %v364 = vor.u32 1.1754944e-38, %v363
    %v365 = vsel %vm362, %v364, %v360
    %v366 = vmul.f32 1.0, %v365
    %v367 = vmul.f32 %v346, %v325
    %v368 = vadd.f32 %v258, %v367
    %v369 = vtanh.pop %v368
    %v370 = vsub.f32 1.0, %v366
    %v371 = vmul.f32 %v370, %v369
    %v372 = vmul.f32 %v366, 0.0
    %v373 = vadd.f32 %v371, %v372
    %374 = vmatpush.msra.mxu0 %v180
    %375 = vmatpush.msra.mxu0 %v177
    %376 = vmatpush.msra.mxu0 %v174
    %377 = vmatpush.msra.mxu0 %v171
    %378 = vmatpush.msra.mxu0 %v168
    %379 = vmatpush.msra.mxu0 %v165
    %380 = vmatpush.msra.mxu0 %v162
    %381 = vmatpush.msra.mxu0 %v159
    %382 = vmatpush.msra.mxu0 %v156
    %383 = vmatpush.msra.mxu0 %v153
    %384 = vmatpush.msra.mxu0 %v150
    %385 = vmatpush.msra.mxu0 %v147
    %386 = vmatpush.msra.mxu0 %v144
    %387 = vmatpush.msra.mxu0 %v141
    %388 = vmatpush.msra.mxu0 %v138
    %389 = vmatpush.msra.mxu0 %v135
    %390 = vmatmul.f32.gmra.mxu0 %v373
    %v391 = vpop.f32.mrf.mxu0
    %v392 = vadd.f32 %v261, %v391
    %393 = vdwg.mxu0
    %394 = vmatpush.msra.mxu0 %v181
    %395 = vmatpush.msra.mxu0 %v178
    %396 = vmatpush.msra.mxu0 %v175
    %397 = vmatpush.msra.mxu0 %v172
    %398 = vmatpush.msra.mxu0 %v169
    %399 = vmatpush.msra.mxu0 %v166
    %400 = vmatpush.msra.mxu0 %v163
    %401 = vmatpush.msra.mxu0 %v160
    %402 = vmatpush.msra.mxu0 %v157
    %403 = vmatpush.msra.mxu0 %v154
    %404 = vmatpush.msra.mxu0 %v151
    %405 = vmatpush.msra.mxu0 %v148
    %406 = vmatpush.msra.mxu0 %v145
    %407 = vmatpush.msra.mxu0 %v142
    %408 = vmatpush.msra.mxu0 %v139
    %409 = vmatpush.msra.mxu0 %v136
    %410 = vmatmul.f32.gmra.mxu0 %v373
    %v411 = vpop.f32.mrf.mxu0
    %v412 = vadd.f32 %v262, %v411
    %413 = vdwg.mxu0
    %414 = vmatpush.msra.mxu0 %v182
    %415 = vmatpush.msra.mxu0 %v179
    %416 = vmatpush.msra.mxu0 %v176
    %417 = vmatpush.msra.mxu0 %v173
    %418 = vmatpush.msra.mxu0 %v170
    %419 = vmatpush.msra.mxu0 %v167
    %420 = vmatpush.msra.mxu0 %v164
    %421 = vmatpush.msra.mxu0 %v161
    %422 = vmatpush.msra.mxu0 %v158
    %423 = vmatpush.msra.mxu0 %v155
    %424 = vmatpush.msra.mxu0 %v152
    %425 = vmatpush.msra.mxu0 %v149
    %426 = vmatpush.msra.mxu0 %v146
    %427 = vmatpush.msra.mxu0 %v143
    %428 = vmatpush.msra.mxu0 %v140
    %429 = vmatpush.msra.mxu0 %v137
    %430 = vmatmul.f32.gmra.mxu0 %v373
    %v431 = vpop.f32.mrf.mxu0
    %v432 = vadd.f32 %v263, %v431
    %433 = vdwg.mxu0
    %v435 = vrot.slane %v392, 7
    %v437 = vadd.f32 %v218, %v435
    %v438 = vxor.u32 %v437, 2147483648
    %v439 = vmul.f32 %v438, 1.442695
    %v440 = vpow.pop %v439
    %v441 = vadd.f32 %v440, 1.0
    %v442 = vrcp.pop %v441
    %v443 = vmul.f32 %v441, %v442
    %v444 = vsub.f32 1.0, %v443
    %v445 = vmul.f32 %v442, %v444
    %v446 = vadd.f32 %v442, %v445
    %vm447 = vweird.f32 %v441
    %vm448 = vweird.f32 %v442
    %vm449 = vmor %vm447, %vm448
    %v450 = vsel %vm449, %v442, %v446
    %v451 = vand.u32 2147483647, %v441
    %vm452 = vcmp.eq.f32.partialorder %v451, 8.507059e+37
    %v453 = vand.u32 %v441, 2147483648
    %v454 = vor.u32 1.1754944e-38, %v453
    %v455 = vsel %vm452, %v454, %v450
    %v456 = vmul.f32 1.0, %v455
    %v458 = vrot.slane %v412, 7
    %v460 = vadd.f32 %v238, %v458
    %v461 = vxor.u32 %v460, 2147483648
    %v462 = vmul.f32 %v461, 1.442695
    %v463 = vpow.pop %v462
    %v464 = vadd.f32 %v463, 1.0
    %v465 = vrcp.pop %v464
    %v466 = vmul.f32 %v464, %v465
    %v467 = vsub.f32 1.0, %v466
    %v468 = vmul.f32 %v465, %v467
    %v469 = vadd.f32 %v465, %v468
    %vm470 = vweird.f32 %v464
    %vm471 = vweird.f32 %v465
    %vm472 = vmor %vm470, %vm471
    %v473 = vsel %vm472, %v465, %v469
    %v474 = vand.u32 2147483647, %v464
    %vm475 = vcmp.eq.f32.partialorder %v474, 8.507059e+37
    %v476 = vand.u32 %v464, 2147483648
    %v477 = vor.u32 1.1754944e-38, %v476
    %v478 = vsel %vm475, %v477, %v473
    %v479 = vmul.f32 1.0, %v478
    %v481 = vrot.slane %v432, 7
    %v483 = vmul.f32 %v456, %v481
    %v484 = vadd.f32 %v258, %v483
    %v485 = vtanh.pop %v484
    %v486 = vsub.f32 1.0, %v479
    %v487 = vmul.f32 %v486, %v485
    %v489 = vrot.slane %v373, 7
    %v491 = vmul.f32 %v479, %v489
    %v492 = vadd.f32 %v487, %v491
    %v494 = vrot.slane %v492, 1
    %496 = vmatpush.msra.mxu0 %v180
    %497 = vmatpush.msra.mxu0 %v177
    %498 = vmatpush.msra.mxu0 %v174
    %499 = vmatpush.msra.mxu0 %v171
    %500 = vmatpush.msra.mxu0 %v168
    %501 = vmatpush.msra.mxu0 %v165
    %502 = vmatpush.msra.mxu0 %v162
    %503 = vmatpush.msra.mxu0 %v159
    %504 = vmatpush.msra.mxu0 %v156
    %505 = vmatpush.msra.mxu0 %v153
    %506 = vmatpush.msra.mxu0 %v150
    %507 = vmatpush.msra.mxu0 %v147
    %508 = vmatpush.msra.mxu0 %v144
    %509 = vmatpush.msra.mxu0 %v141
    %510 = vmatpush.msra.mxu0 %v138
    %511 = vmatpush.msra.mxu0 %v135
    %512 = vmatmul.f32.gmra.mxu0 %v494
    %v513 = vpop.f32.mrf.mxu0
    %v514 = vadd.f32 %v261, %v513
    %515 = vdwg.mxu0
    %516 = vmatpush.msra.mxu0 %v181
    %517 = vmatpush.msra.mxu0 %v178
    %518 = vmatpush.msra.mxu0 %v175
    %519 = vmatpush.msra.mxu0 %v172
    %520 = vmatpush.msra.mxu0 %v169
    %521 = vmatpush.msra.mxu0 %v166
    %522 = vmatpush.msra.mxu0 %v163
    %523 = vmatpush.msra.mxu0 %v160
    %524 = vmatpush.msra.mxu0 %v157
    %525 = vmatpush.msra.mxu0 %v154
    %526 = vmatpush.msra.mxu0 %v151
    %527 = vmatpush.msra.mxu0 %v148
    %528 = vmatpush.msra.mxu0 %v145
    %529 = vmatpush.msra.mxu0 %v142
    %530 = vmatpush.msra.mxu0 %v139
    %531 = vmatpush.msra.mxu0 %v136
    %532 = vmatmul.f32.gmra.mxu0 %v494
    %v533 = vpop.f32.mrf.mxu0
    %v534 = vadd.f32 %v262, %v533
    %535 = vdwg.mxu0
    %536 = vmatpush.msra.mxu0 %v182
    %537 = vmatpush.msra.mxu0 %v179
    %538 = vmatpush.msra.mxu0 %v176
    %539 = vmatpush.msra.mxu0 %v173
    %540 = vmatpush.msra.mxu0 %v170
    %541 = vmatpush.msra.mxu0 %v167
    %542 = vmatpush.msra.mxu0 %v164
    %543 = vmatpush.msra.mxu0 %v161
    %544 = vmatpush.msra.mxu0 %v158
    %545 = vmatpush.msra.mxu0 %v155
    %546 = vmatpush.msra.mxu0 %v152
    %547 = vmatpush.msra.mxu0 %v149
    %548 = vmatpush.msra.mxu0 %v146
    %549 = vmatpush.msra.mxu0 %v143
    %550 = vmatpush.msra.mxu0 %v140
    %551 = vmatpush.msra.mxu0 %v137
    %552 = vmatmul.f32.gmra.mxu0 %v494
    %v553 = vpop.f32.mrf.mxu0
    %v554 = vadd.f32 %v263, %v553
    %555 = vdwg.mxu0
    %v557 = vrot.slane %v514, 6
    %v559 = vadd.f32 %v218, %v557
    %v560 = vxor.u32 %v559, 2147483648
    %v561 = vmul.f32 %v560, 1.442695
    %v562 = vpow.pop %v561
    %v563 = vadd.f32 %v562, 1.0
    %v564 = vrcp.pop %v563
    %v565 = vmul.f32 %v563, %v564
    %v566 = vsub.f32 1.0, %v565
    %v567 = vmul.f32 %v564, %v566
    %v568 = vadd.f32 %v564, %v567
    %vm569 = vweird.f32 %v563
    %vm570 = vweird.f32 %v564
    %vm571 = vmor %vm569, %vm570
    %v572 = vsel %vm571, %v564, %v568
    %v573 = vand.u32 2147483647, %v563
    %vm574 = vcmp.eq.f32.partialorder %v573, 8.507059e+37
    %v575 = vand.u32 %v563, 2147483648
    %v576 = vor.u32 1.1754944e-38, %v575
    %v577 = vsel %vm574, %v576, %v572
    %v578 = vmul.f32 1.0, %v577
    %v580 = vrot.slane %v534, 6
    %v582 = vadd.f32 %v238, %v580
    %v583 = vxor.u32 %v582, 2147483648
    %v584 = vmul.f32 %v583, 1.442695
    %v585 = vpow.pop %v584
    %v586 = vadd.f32 %v585, 1.0
    %v587 = vrcp.pop %v586
    %v588 = vmul.f32 %v586, %v587
    %v589 = vsub.f32 1.0, %v588
    %v590 = vmul.f32 %v587, %v589
    %v591 = vadd.f32 %v587, %v590
    %vm592 = vweird.f32 %v586
    %vm593 = vweird.f32 %v587
    %vm594 = vmor %vm592, %vm593
    %v595 = vsel %vm594, %v587, %v591
    %v596 = vand.u32 2147483647, %v586
    %vm597 = vcmp.eq.f32.partialorder %v596, 8.507059e+37
    %v598 = vand.u32 %v586, 2147483648
    %v599 = vor.u32 1.1754944e-38, %v598
    %v600 = vsel %vm597, %v599, %v595
    %v601 = vmul.f32 1.0, %v600
    %v603 = vrot.slane %v554, 6
    %v605 = vmul.f32 %v578, %v603
    %v606 = vadd.f32 %v258, %v605
    %v607 = vtanh.pop %v606
    %v608 = vsub.f32 1.0, %v601
    %v609 = vmul.f32 %v608, %v607
    %v610 = vrot.slane %v492, 7
    %v612 = vmul.f32 %v601, %v610
    %v613 = vadd.f32 %v609, %v612
    %v615 = vrot.slane %v613, 2
    %617 = vmatpush.msra.mxu0 %v180
    %618 = vmatpush.msra.mxu0 %v177
    %619 = vmatpush.msra.mxu0 %v174
    %620 = vmatpush.msra.mxu0 %v171
    %621 = vmatpush.msra.mxu0 %v168
    %622 = vmatpush.msra.mxu0 %v165
    %623 = vmatpush.msra.mxu0 %v162
    %624 = vmatpush.msra.mxu0 %v159
    %625 = vmatpush.msra.mxu0 %v156
    %626 = vmatpush.msra.mxu0 %v153
    %627 = vmatpush.msra.mxu0 %v150
    %628 = vmatpush.msra.mxu0 %v147
    %629 = vmatpush.msra.mxu0 %v144
    %630 = vmatpush.msra.mxu0 %v141
    %631 = vmatpush.msra.mxu0 %v138
    %632 = vmatpush.msra.mxu0 %v135
    %633 = vmatmul.f32.gmra.mxu0 %v615
    %v634 = vpop.f32.mrf.mxu0
    %v635 = vadd.f32 %v261, %v634
    %636 = vdwg.mxu0
    %637 = vmatpush.msra.mxu0 %v181
    %638 = vmatpush.msra.mxu0 %v178
    %639 = vmatpush.msra.mxu0 %v175
    %640 = vmatpush.msra.mxu0 %v172
    %641 = vmatpush.msra.mxu0 %v169
    %642 = vmatpush.msra.mxu0 %v166
    %643 = vmatpush.msra.mxu0 %v163
    %644 = vmatpush.msra.mxu0 %v160
    %645 = vmatpush.msra.mxu0 %v157
    %646 = vmatpush.msra.mxu0 %v154
    %647 = vmatpush.msra.mxu0 %v151
    %648 = vmatpush.msra.mxu0 %v148
    %649 = vmatpush.msra.mxu0 %v145
    %650 = vmatpush.msra.mxu0 %v142
    %651 = vmatpush.msra.mxu0 %v139
    %652 = vmatpush.msra.mxu0 %v136
    %653 = vmatmul.f32.gmra.mxu0 %v615
    %v654 = vpop.f32.mrf.mxu0
    %v655 = vadd.f32 %v262, %v654
    %656 = vdwg.mxu0
    %657 = vmatpush.msra.mxu0 %v182
    %658 = vmatpush.msra.mxu0 %v179
    %659 = vmatpush.msra.mxu0 %v176
    %660 = vmatpush.msra.mxu0 %v173
    %661 = vmatpush.msra.mxu0 %v170
    %662 = vmatpush.msra.mxu0 %v167
    %663 = vmatpush.msra.mxu0 %v164
    %664 = vmatpush.msra.mxu0 %v161
    %665 = vmatpush.msra.mxu0 %v158
    %666 = vmatpush.msra.mxu0 %v155
    %667 = vmatpush.msra.mxu0 %v152
    %668 = vmatpush.msra.mxu0 %v149
    %669 = vmatpush.msra.mxu0 %v146
    %670 = vmatpush.msra.mxu0 %v143
    %671 = vmatpush.msra.mxu0 %v140
    %672 = vmatpush.msra.mxu0 %v137
    %673 = vmatmul.f32.gmra.mxu0 %v615
    %v674 = vpop.f32.mrf.mxu0
    %v675 = vadd.f32 %v263, %v674
    %676 = vdwg.mxu0
    %v678 = vrot.slane %v635, 5
    %v680 = vadd.f32 %v218, %v678
    %v681 = vxor.u32 %v680, 2147483648
    %v682 = vmul.f32 %v681, 1.442695
    %v683 = vpow.pop %v682
    %v684 = vadd.f32 %v683, 1.0
    %v685 = vrcp.pop %v684
    %v686 = vmul.f32 %v684, %v685
    %v687 = vsub.f32 1.0, %v686
    %v688 = vmul.f32 %v685, %v687
    %v689 = vadd.f32 %v685, %v688
    %vm690 = vweird.f32 %v684
    %vm691 = vweird.f32 %v685
    %vm692 = vmor %vm690, %vm691
    %v693 = vsel %vm692, %v685, %v689
    %v694 = vand.u32 2147483647, %v684
    %vm695 = vcmp.eq.f32.partialorder %v694, 8.507059e+37
    %v696 = vand.u32 %v684, 2147483648
    %v697 = vor.u32 1.1754944e-38, %v696
    %v698 = vsel %vm695, %v697, %v693
    %v699 = vmul.f32 1.0, %v698
    %v701 = vrot.slane %v655, 5
    %v703 = vadd.f32 %v238, %v701
    %v704 = vxor.u32 %v703, 2147483648
    %v705 = vmul.f32 %v704, 1.442695
    %v706 = vpow.pop %v705
    %v707 = vadd.f32 %v706, 1.0
    %v708 = vrcp.pop %v707
    %v709 = vmul.f32 %v707, %v708
    %v710 = vsub.f32 1.0, %v709
    %v711 = vmul.f32 %v708, %v710
    %v712 = vadd.f32 %v708, %v711
    %vm713 = vweird.f32 %v707
    %vm714 = vweird.f32 %v708
    %vm715 = vmor %vm713, %vm714
    %v716 = vsel %vm715, %v708, %v712
    %v717 = vand.u32 2147483647, %v707
    %vm718 = vcmp.eq.f32.partialorder %v717, 8.507059e+37
    %v719 = vand.u32 %v707, 2147483648
    %v720 = vor.u32 1.1754944e-38, %v719
    %v721 = vsel %vm718, %v720, %v716
    %v722 = vmul.f32 1.0, %v721
    %v724 = vrot.slane %v675, 5
    %v726 = vmul.f32 %v699, %v724
    %v727 = vadd.f32 %v258, %v726
    %v728 = vtanh.pop %v727
    %v729 = vsub.f32 1.0, %v722
    %v730 = vmul.f32 %v729, %v728
    %v731 = vrot.slane %v613, 7
    %v733 = vmul.f32 %v722, %v731
    %v734 = vadd.f32 %v730, %v733
    %v736 = vrot.slane %v734, 3
    %738 = vmatpush.msra.mxu0 %v180
    %739 = vmatpush.msra.mxu0 %v177
    %740 = vmatpush.msra.mxu0 %v174
    %741 = vmatpush.msra.mxu0 %v171
    %742 = vmatpush.msra.mxu0 %v168
    %743 = vmatpush.msra.mxu0 %v165
    %744 = vmatpush.msra.mxu0 %v162
    %745 = vmatpush.msra.mxu0 %v159
    %746 = vmatpush.msra.mxu0 %v156
    %747 = vmatpush.msra.mxu0 %v153
    %748 = vmatpush.msra.mxu0 %v150
    %749 = vmatpush.msra.mxu0 %v147
    %750 = vmatpush.msra.mxu0 %v144
    %751 = vmatpush.msra.mxu0 %v141
    %752 = vmatpush.msra.mxu0 %v138
    %753 = vmatpush.msra.mxu0 %v135
    %754 = vmatmul.f32.gmra.mxu0 %v736
    %v755 = vpop.f32.mrf.mxu0
    %v756 = vadd.f32 %v261, %v755
    %757 = vdwg.mxu0
    %758 = vmatpush.msra.mxu0 %v181
    %759 = vmatpush.msra.mxu0 %v178
    %760 = vmatpush.msra.mxu0 %v175
    %761 = vmatpush.msra.mxu0 %v172
    %762 = vmatpush.msra.mxu0 %v169
    %763 = vmatpush.msra.mxu0 %v166
    %764 = vmatpush.msra.mxu0 %v163
    %765 = vmatpush.msra.mxu0 %v160
    %766 = vmatpush.msra.mxu0 %v157
    %767 = vmatpush.msra.mxu0 %v154
    %768 = vmatpush.msra.mxu0 %v151
    %769 = vmatpush.msra.mxu0 %v148
    %770 = vmatpush.msra.mxu0 %v145
    %771 = vmatpush.msra.mxu0 %v142
    %772 = vmatpush.msra.mxu0 %v139
    %773 = vmatpush.msra.mxu0 %v136
    %774 = vmatmul.f32.gmra.mxu0 %v736
    %v775 = vpop.f32.mrf.mxu0
    %v776 = vadd.f32 %v262, %v775
    %777 = vdwg.mxu0
    %778 = vmatpush.msra.mxu0 %v182
    %779 = vmatpush.msra.mxu0 %v179
    %780 = vmatpush.msra.mxu0 %v176
    %781 = vmatpush.msra.mxu0 %v173
    %782 = vmatpush.msra.mxu0 %v170
    %783 = vmatpush.msra.mxu0 %v167
    %784 = vmatpush.msra.mxu0 %v164
    %785 = vmatpush.msra.mxu0 %v161
    %786 = vmatpush.msra.mxu0 %v158
    %787 = vmatpush.msra.mxu0 %v155
    %788 = vmatpush.msra.mxu0 %v152
    %789 = vmatpush.msra.mxu0 %v149
    %790 = vmatpush.msra.mxu0 %v146
    %791 = vmatpush.msra.mxu0 %v143
    %792 = vmatpush.msra.mxu0 %v140
    %793 = vmatpush.msra.mxu0 %v137
    %794 = vmatmul.f32.gmra.mxu0 %v736
    %v795 = vpop.f32.mrf.mxu0
    %v796 = vadd.f32 %v263, %v795
    %797 = vdwg.mxu0
    %v799 = vrot.slane %v756, 4
    %v801 = vadd.f32 %v218, %v799
    %v802 = vxor.u32 %v801, 2147483648
    %v803 = vmul.f32 %v802, 1.442695
    %v804 = vpow.pop %v803
    %v805 = vadd.f32 %v804, 1.0
    %v806 = vrcp.pop %v805
    %v807 = vmul.f32 %v805, %v806
    %v808 = vsub.f32 1.0, %v807
    %v809 = vmul.f32 %v806, %v808
    %v810 = vadd.f32 %v806, %v809
    %vm811 = vweird.f32 %v805
    %vm812 = vweird.f32 %v806
    %vm813 = vmor %vm811, %vm812
    %v814 = vsel %vm813, %v806, %v810
    %v815 = vand.u32 2147483647, %v805
    %vm816 = vcmp.eq.f32.partialorder %v815, 8.507059e+37
    %v817 = vand.u32 %v805, 2147483648
    %v818 = vor.u32 1.1754944e-38, %v817
    %v819 = vsel %vm816, %v818, %v814
    %v820 = vmul.f32 1.0, %v819
    %v822 = vrot.slane %v776, 4
    %v824 = vadd.f32 %v238, %v822
    %v825 = vxor.u32 %v824, 2147483648
    %v826 = vmul.f32 %v825, 1.442695
    %v827 = vpow.pop %v826
    %v828 = vadd.f32 %v827, 1.0
    %v829 = vrcp.pop %v828
    %v830 = vmul.f32 %v828, %v829
    %v831 = vsub.f32 1.0, %v830
    %v832 = vmul.f32 %v829, %v831
    %v833 = vadd.f32 %v829, %v832
    %vm834 = vweird.f32 %v828
    %vm835 = vweird.f32 %v829
    %vm836 = vmor %vm834, %vm835
    %v837 = vsel %vm836, %v829, %v833
    %v838 = vand.u32 2147483647, %v828
    %vm839 = vcmp.eq.f32.partialorder %v838, 8.507059e+37
    %v840 = vand.u32 %v828, 2147483648
    %v841 = vor.u32 1.1754944e-38, %v840
    %v842 = vsel %vm839, %v841, %v837
    %v843 = vmul.f32 1.0, %v842
    %v845 = vrot.slane %v796, 4
    %v847 = vmul.f32 %v820, %v845
    %v848 = vadd.f32 %v258, %v847
    %v849 = vtanh.pop %v848
    %v850 = vsub.f32 1.0, %v843
    %v851 = vmul.f32 %v850, %v849
    %v852 = vrot.slane %v734, 7
    %v854 = vmul.f32 %v843, %v852
    %v855 = vadd.f32 %v851, %v854
    %v857 = vrot.slane %v855, 4
    %859 = vmatpush.msra.mxu0 %v180
    %860 = vmatpush.msra.mxu0 %v177
    %861 = vmatpush.msra.mxu0 %v174
    %862 = vmatpush.msra.mxu0 %v171
    %863 = vmatpush.msra.mxu0 %v168
    %864 = vmatpush.msra.mxu0 %v165
    %865 = vmatpush.msra.mxu0 %v162
    %866 = vmatpush.msra.mxu0 %v159
    %867 = vmatpush.msra.mxu0 %v156
    %868 = vmatpush.msra.mxu0 %v153
    %869 = vmatpush.msra.mxu0 %v150
    %870 = vmatpush.msra.mxu0 %v147
    %871 = vmatpush.msra.mxu0 %v144
    %872 = vmatpush.msra.mxu0 %v141
    %873 = vmatpush.msra.mxu0 %v138
    %874 = vmatpush.msra.mxu0 %v135
    %875 = vmatmul.f32.gmra.mxu0 %v857
    %v876 = vpop.f32.mrf.mxu0
    %v877 = vadd.f32 %v261, %v876
    %878 = vdwg.mxu0
    %879 = vmatpush.msra.mxu0 %v181
    %880 = vmatpush.msra.mxu0 %v178
    %881 = vmatpush.msra.mxu0 %v175
    %882 = vmatpush.msra.mxu0 %v172
    %883 = vmatpush.msra.mxu0 %v169
    %884 = vmatpush.msra.mxu0 %v166
    %885 = vmatpush.msra.mxu0 %v163
    %886 = vmatpush.msra.mxu0 %v160
    %887 = vmatpush.msra.mxu0 %v157
    %888 = vmatpush.msra.mxu0 %v154
    %889 = vmatpush.msra.mxu0 %v151
    %890 = vmatpush.msra.mxu0 %v148
    %891 = vmatpush.msra.mxu0 %v145
    %892 = vmatpush.msra.mxu0 %v142
    %893 = vmatpush.msra.mxu0 %v139
    %894 = vmatpush.msra.mxu0 %v136
    %895 = vmatmul.f32.gmra.mxu0 %v857
    %v896 = vpop.f32.mrf.mxu0
    %v897 = vadd.f32 %v262, %v896
    %898 = vdwg.mxu0
    %899 = vmatpush.msra.mxu0 %v182
    %900 = vmatpush.msra.mxu0 %v179
    %901 = vmatpush.msra.mxu0 %v176
    %902 = vmatpush.msra.mxu0 %v173
    %903 = vmatpush.msra.mxu0 %v170
    %904 = vmatpush.msra.mxu0 %v167
    %905 = vmatpush.msra.mxu0 %v164
    %906 = vmatpush.msra.mxu0 %v161
    %907 = vmatpush.msra.mxu0 %v158
    %908 = vmatpush.msra.mxu0 %v155
    %909 = vmatpush.msra.mxu0 %v152
    %910 = vmatpush.msra.mxu0 %v149
    %911 = vmatpush.msra.mxu0 %v146
    %912 = vmatpush.msra.mxu0 %v143
    %913 = vmatpush.msra.mxu0 %v140
    %914 = vmatpush.msra.mxu0 %v137
    %915 = vmatmul.f32.gmra.mxu0 %v857
    %v916 = vpop.f32.mrf.mxu0
    %v917 = vadd.f32 %v263, %v916
    %918 = vdwg.mxu0
    %v920 = vrot.slane %v877, 3
    %v922 = vadd.f32 %v218, %v920
    %v923 = vxor.u32 %v922, 2147483648
    %v924 = vmul.f32 %v923, 1.442695
    %v925 = vpow.pop %v924
    %v926 = vadd.f32 %v925, 1.0
    %v927 = vrcp.pop %v926
    %v928 = vmul.f32 %v926, %v927
    %v929 = vsub.f32 1.0, %v928
    %v930 = vmul.f32 %v927, %v929
    %v931 = vadd.f32 %v927, %v930
    %vm932 = vweird.f32 %v926
    %vm933 = vweird.f32 %v927
    %vm934 = vmor %vm932, %vm933
    %v935 = vsel %vm934, %v927, %v931
    %v936 = vand.u32 2147483647, %v926
    %vm937 = vcmp.eq.f32.partialorder %v936, 8.507059e+37
    %v938 = vand.u32 %v926, 2147483648
    %v939 = vor.u32 1.1754944e-38, %v938
    %v940 = vsel %vm937, %v939, %v935
    %v941 = vmul.f32 1.0, %v940
    %v943 = vrot.slane %v897, 3
    %v945 = vadd.f32 %v238, %v943
    %v946 = vxor.u32 %v945, 2147483648
    %v947 = vmul.f32 %v946, 1.442695
    %v948 = vpow.pop %v947
    %v949 = vadd.f32 %v948, 1.0
    %v950 = vrcp.pop %v949
    %v951 = vmul.f32 %v949, %v950
    %v952 = vsub.f32 1.0, %v951
    %v953 = vmul.f32 %v950, %v952
    %v954 = vadd.f32 %v950, %v953
    %vm955 = vweird.f32 %v949
    %vm956 = vweird.f32 %v950
    %vm957 = vmor %vm955, %vm956
    %v958 = vsel %vm957, %v950, %v954
    %v959 = vand.u32 2147483647, %v949
    %vm960 = vcmp.eq.f32.partialorder %v959, 8.507059e+37
    %v961 = vand.u32 %v949, 2147483648
    %v962 = vor.u32 1.1754944e-38, %v961
    %v963 = vsel %vm960, %v962, %v958
    %v964 = vmul.f32 1.0, %v963
    %v966 = vrot.slane %v917, 3
    %v968 = vmul.f32 %v941, %v966
    %v969 = vadd.f32 %v258, %v968
    %v970 = vtanh.pop %v969
    %v971 = vsub.f32 1.0, %v964
    %v972 = vmul.f32 %v971, %v970
    %v973 = vrot.slane %v855, 7
    %v975 = vmul.f32 %v964, %v973
    %v976 = vadd.f32 %v972, %v975
    %v978 = vrot.slane %v976, 5
    %980 = vmatpush.msra.mxu0 %v180
    %981 = vmatpush.msra.mxu0 %v177
    %982 = vmatpush.msra.mxu0 %v174
    %983 = vmatpush.msra.mxu0 %v171
    %984 = vmatpush.msra.mxu0 %v168
    %985 = vmatpush.msra.mxu0 %v165
    %986 = vmatpush.msra.mxu0 %v162
    %987 = vmatpush.msra.mxu0 %v159
    %988 = vmatpush.msra.mxu0 %v156
    %989 = vmatpush.msra.mxu0 %v153
    %990 = vmatpush.msra.mxu0 %v150
    %991 = vmatpush.msra.mxu0 %v147
    %992 = vmatpush.msra.mxu0 %v144
    %993 = vmatpush.msra.mxu0 %v141
    %994 = vmatpush.msra.mxu0 %v138
    %995 = vmatpush.msra.mxu0 %v135
    %996 = vmatmul.f32.gmra.mxu0 %v978
    %v997 = vpop.f32.mrf.mxu0
    %v998 = vadd.f32 %v261, %v997
    %999 = vdwg.mxu0
    %1000 = vmatpush.msra.mxu0 %v181
    %1001 = vmatpush.msra.mxu0 %v178
    %1002 = vmatpush.msra.mxu0 %v175
    %1003 = vmatpush.msra.mxu0 %v172
    %1004 = vmatpush.msra.mxu0 %v169
    %1005 = vmatpush.msra.mxu0 %v166
    %1006 = vmatpush.msra.mxu0 %v163
    %1007 = vmatpush.msra.mxu0 %v160
    %1008 = vmatpush.msra.mxu0 %v157
    %1009 = vmatpush.msra.mxu0 %v154
    %1010 = vmatpush.msra.mxu0 %v151
    %1011 = vmatpush.msra.mxu0 %v148
    %1012 = vmatpush.msra.mxu0 %v145
    %1013 = vmatpush.msra.mxu0 %v142
    %1014 = vmatpush.msra.mxu0 %v139
    %1015 = vmatpush.msra.mxu0 %v136
    %1016 = vmatmul.f32.gmra.mxu0 %v978
    %v1017 = vpop.f32.mrf.mxu0
    %v1018 = vadd.f32 %v262, %v1017
    %1019 = vdwg.mxu0
    %1020 = vmatpush.msra.mxu0 %v182
    %1021 = vmatpush.msra.mxu0 %v179
    %1022 = vmatpush.msra.mxu0 %v176
    %1023 = vmatpush.msra.mxu0 %v173
    %1024 = vmatpush.msra.mxu0 %v170
    %1025 = vmatpush.msra.mxu0 %v167
    %1026 = vmatpush.msra.mxu0 %v164
    %1027 = vmatpush.msra.mxu0 %v161
    %1028 = vmatpush.msra.mxu0 %v158
    %1029 = vmatpush.msra.mxu0 %v155
    %1030 = vmatpush.msra.mxu0 %v152
    %1031 = vmatpush.msra.mxu0 %v149
    %1032 = vmatpush.msra.mxu0 %v146
    %1033 = vmatpush.msra.mxu0 %v143
    %1034 = vmatpush.msra.mxu0 %v140
    %1035 = vmatpush.msra.mxu0 %v137
    %1036 = vmatmul.f32.gmra.mxu0 %v978
    %v1037 = vpop.f32.mrf.mxu0
    %v1038 = vadd.f32 %v263, %v1037
    %1039 = vdwg.mxu0
    %v1041 = vrot.slane %v998, 2
    %v1043 = vadd.f32 %v218, %v1041
    %v1044 = vxor.u32 %v1043, 2147483648
    %v1045 = vmul.f32 %v1044, 1.442695
    %v1046 = vpow.pop %v1045
    %v1047 = vadd.f32 %v1046, 1.0
    %v1048 = vrcp.pop %v1047
    %v1049 = vmul.f32 %v1047, %v1048
    %v1050 = vsub.f32 1.0, %v1049
    %v1051 = vmul.f32 %v1048, %v1050
    %v1052 = vadd.f32 %v1048, %v1051
    %vm1053 = vweird.f32 %v1047
    %vm1054 = vweird.f32 %v1048
    %vm1055 = vmor %vm1053, %vm1054
    %v1056 = vsel %vm1055, %v1048, %v1052
    %v1057 = vand.u32 2147483647, %v1047
    %vm1058 = vcmp.eq.f32.partialorder %v1057, 8.507059e+37
    %v1059 = vand.u32 %v1047, 2147483648
    %v1060 = vor.u32 1.1754944e-38, %v1059
    %v1061 = vsel %vm1058, %v1060, %v1056
    %v1062 = vmul.f32 1.0, %v1061
    %v1064 = vrot.slane %v1018, 2
    %v1066 = vadd.f32 %v238, %v1064
    %v1067 = vxor.u32 %v1066, 2147483648
    %v1068 = vmul.f32 %v1067, 1.442695
    %v1069 = vpow.pop %v1068
    %v1070 = vadd.f32 %v1069, 1.0
    %v1071 = vrcp.pop %v1070
    %v1072 = vmul.f32 %v1070, %v1071
    %v1073 = vsub.f32 1.0, %v1072
    %v1074 = vmul.f32 %v1071, %v1073
    %v1075 = vadd.f32 %v1071, %v1074
    %vm1076 = vweird.f32 %v1070
    %vm1077 = vweird.f32 %v1071
    %vm1078 = vmor %vm1076, %vm1077
    %v1079 = vsel %vm1078, %v1071, %v1075
    %v1080 = vand.u32 2147483647, %v1070
    %vm1081 = vcmp.eq.f32.partialorder %v1080, 8.507059e+37
    %v1082 = vand.u32 %v1070, 2147483648
    %v1083 = vor.u32 1.1754944e-38, %v1082
    %v1084 = vsel %vm1081, %v1083, %v1079
    %v1085 = vmul.f32 1.0, %v1084
    %v1087 = vrot.slane %v1038, 2
    %v1089 = vmul.f32 %v1062, %v1087
    %v1090 = vadd.f32 %v258, %v1089
    %v1091 = vtanh.pop %v1090
    %v1092 = vsub.f32 1.0, %v1085
    %v1093 = vmul.f32 %v1092, %v1091
    %v1094 = vrot.slane %v976, 7
    %v1096 = vmul.f32 %v1085, %v1094
    %v1097 = vadd.f32 %v1093, %v1096
    %v1099 = vrot.slane %v1097, 6
    %1101 = vmatpush.msra.mxu0 %v180
    %1102 = vmatpush.msra.mxu0 %v177
    %1103 = vmatpush.msra.mxu0 %v174
    %1104 = vmatpush.msra.mxu0 %v171
    %1105 = vmatpush.msra.mxu0 %v168
    %1106 = vmatpush.msra.mxu0 %v165
    %1107 = vmatpush.msra.mxu0 %v162
    %1108 = vmatpush.msra.mxu0 %v159
    %1109 = vmatpush.msra.mxu0 %v156
    %1110 = vmatpush.msra.mxu0 %v153
    %1111 = vmatpush.msra.mxu0 %v150
    %1112 = vmatpush.msra.mxu0 %v147
    %1113 = vmatpush.msra.mxu0 %v144
    %1114 = vmatpush.msra.mxu0 %v141
    %1115 = vmatpush.msra.mxu0 %v138
    %1116 = vmatpush.msra.mxu0 %v135
    %1117 = vmatmul.f32.gmra.mxu0 %v1099
    %v1118 = vpop.f32.mrf.mxu0
    %v1119 = vadd.f32 %v261, %v1118
    %1120 = vdwg.mxu0
    %1121 = vmatpush.msra.mxu0 %v181
    %1122 = vmatpush.msra.mxu0 %v178
    %1123 = vmatpush.msra.mxu0 %v175
    %1124 = vmatpush.msra.mxu0 %v172
    %1125 = vmatpush.msra.mxu0 %v169
    %1126 = vmatpush.msra.mxu0 %v166
    %1127 = vmatpush.msra.mxu0 %v163
    %1128 = vmatpush.msra.mxu0 %v160
    %1129 = vmatpush.msra.mxu0 %v157
    %1130 = vmatpush.msra.mxu0 %v154
    %1131 = vmatpush.msra.mxu0 %v151
    %1132 = vmatpush.msra.mxu0 %v148
    %1133 = vmatpush.msra.mxu0 %v145
    %1134 = vmatpush.msra.mxu0 %v142
    %1135 = vmatpush.msra.mxu0 %v139
    %1136 = vmatpush.msra.mxu0 %v136
    %1137 = vmatmul.f32.gmra.mxu0 %v1099
    %v1138 = vpop.f32.mrf.mxu0
    %v1139 = vadd.f32 %v262, %v1138
    %1140 = vdwg.mxu0
    %1141 = vmatpush.msra.mxu0 %v182
    %1142 = vmatpush.msra.mxu0 %v179
    %1143 = vmatpush.msra.mxu0 %v176
    %1144 = vmatpush.msra.mxu0 %v173
    %1145 = vmatpush.msra.mxu0 %v170
    %1146 = vmatpush.msra.mxu0 %v167
    %1147 = vmatpush.msra.mxu0 %v164
    %1148 = vmatpush.msra.mxu0 %v161
    %1149 = vmatpush.msra.mxu0 %v158
    %1150 = vmatpush.msra.mxu0 %v155
    %1151 = vmatpush.msra.mxu0 %v152
    %1152 = vmatpush.msra.mxu0 %v149
    %1153 = vmatpush.msra.mxu0 %v146
    %1154 = vmatpush.msra.mxu0 %v143
    %1155 = vmatpush.msra.mxu0 %v140
    %1156 = vmatpush.msra.mxu0 %v137
    %1157 = vmatmul.f32.gmra.mxu0 %v1099
    %v1158 = vpop.f32.mrf.mxu0
    %v1159 = vadd.f32 %v263, %v1158
    %1160 = vdwg.mxu0
    %v1162 = vrot.slane %v1119, 1
    %v1164 = vadd.f32 %v218, %v1162
    %v1165 = vxor.u32 %v1164, 2147483648
    %v1166 = vmul.f32 %v1165, 1.442695
    %v1167 = vpow.pop %v1166
    %v1168 = vadd.f32 %v1167, 1.0
    %v1169 = vrcp.pop %v1168
    %v1170 = vmul.f32 %v1168, %v1169
    %v1171 = vsub.f32 1.0, %v1170
    %v1172 = vmul.f32 %v1169, %v1171
    %v1173 = vadd.f32 %v1169, %v1172
    %vm1174 = vweird.f32 %v1168
    %vm1175 = vweird.f32 %v1169
    %vm1176 = vmor %vm1174, %vm1175
    %v1177 = vsel %vm1176, %v1169, %v1173
    %v1178 = vand.u32 2147483647, %v1168
    %vm1179 = vcmp.eq.f32.partialorder %v1178, 8.507059e+37
    %v1180 = vand.u32 %v1168, 2147483648
    %v1181 = vor.u32 1.1754944e-38, %v1180
    %v1182 = vsel %vm1179, %v1181, %v1177
    %v1183 = vmul.f32 1.0, %v1182
    %v1185 = vrot.slane %v1139, 1
    %v1187 = vadd.f32 %v238, %v1185
    %v1188 = vxor.u32 %v1187, 2147483648
    %v1189 = vmul.f32 %v1188, 1.442695
    %v1190 = vpow.pop %v1189
    %v1191 = vadd.f32 %v1190, 1.0
    %v1192 = vrcp.pop %v1191
    %v1193 = vmul.f32 %v1191, %v1192
    %v1194 = vsub.f32 1.0, %v1193
    %v1195 = vmul.f32 %v1192, %v1194
    %v1196 = vadd.f32 %v1192, %v1195
    %vm1197 = vweird.f32 %v1191
    %vm1198 = vweird.f32 %v1192
    %vm1199 = vmor %vm1197, %vm1198
    %v1200 = vsel %vm1199, %v1192, %v1196
    %v1201 = vand.u32 2147483647, %v1191
    %vm1202 = vcmp.eq.f32.partialorder %v1201, 8.507059e+37
    %v1203 = vand.u32 %v1191, 2147483648
    %v1204 = vor.u32 1.1754944e-38, %v1203
    %v1205 = vsel %vm1202, %v1204, %v1200
    %v1206 = vmul.f32 1.0, %v1205
    %v1208 = vrot.slane %v1159, 1
    %v1210 = vmul.f32 %v1183, %v1208
    %v1211 = vadd.f32 %v258, %v1210
    %v1212 = vtanh.pop %v1211
    %v1213 = vsub.f32 1.0, %v1206
    %v1214 = vmul.f32 %v1213, %v1212
    %v1215 = vrot.slane %v1097, 7
    %v1217 = vmul.f32 %v1206, %v1215
    %v1218 = vadd.f32 %v1214, %v1217
    %vm1219 = vcmask 1040384
    %v1220 = vsel %vm1219, %v373, %v492
    %vm1221 = vcmask 1041408
    %v1222 = vsel %vm1221, %v1220, %v613
    %vm1223 = vcmask 1042432
    %v1224 = vsel %vm1223, %v1222, %v734
    %vm1225 = vcmask 1043456
    %v1226 = vsel %vm1225, %v1224, %v855
    %vm1227 = vcmask 1044480
    %v1228 = vsel %vm1227, %v1226, %v976
    %vm1229 = vcmask 1045504
    %v1230 = vsel %vm1229, %v1228, %v1097
    %vm1231 = vcmask 1046528
    %v1232 = vsel %vm1231, %v1230, %v1218
    %v1234 = vrot.slane %v1218, 7
    %v1236 = vrot.slane %v1097, 5
    %v1238 = vrot.slane %v976, 3
    %v1240 = vrot.slane %v855, 1
    %v1242 = vrot.slane %v613, 5
    %v1244 = vrot.slane %v492, 3
    %v1246 = vrot.slane %v373, 1
    %v1248 = vsel %vm1219, %v1234, %v1236
    %v1249 = vsel %vm1221, %v1248, %v1238
    %v1250 = vsel %vm1223, %v1249, %v1240
    %v1251 = vsel %vm1225, %v1250, %v852
    %v1252 = vsel %vm1227, %v1251, %v1242
    %v1253 = vsel %vm1229, %v1252, %v1244
    %v1254 = vsel %vm1231, %v1253, %v1246
    %v1255 = vsel %vm196, %v1232, %v1254
    %1256 = vadd.xlane.f32.xlu0 %v1255
    %v1257 = vpop.xlane.xlu0 %1256
    %v1258 = vrcp.pop 128.0
    %v1259 = vmul.f32 128.0, %v1258
    %v1260 = vsub.f32 1.0, %v1259
    %v1261 = vmul.f32 %v1258, %v1260
    %v1262 = vadd.f32 %v1258, %v1261
    %vm1263 = vweird.f32 %v1258
    %v1264 = vsel %vm1263, %v1258, %v1262
    %v1265 = vmul.f32 %v1257, %v1264
    %v1266 = vsub.f32 %v1255, %v1265
    %v1267 = vmul.f32 %v1266, %v1266
    %1268 = vadd.xlane.f32.xlu0 %v1267
    %v1269 = vpop.xlane.xlu0 %1268
    %v1270 = vmul.f32 %v1269, %v1264
    %v1271 = vadd.f32 %v1270, 1e-05
    %v1272 = vrsqrt.pop %v1271
    %v1273 = vmul.f32 %v1272, %v1271
    %v1274 = vmul.f32 %v1273, %v1272
    %v1275 = vmul.f32 0.5, %v1274
    %v1276 = vsub.f32 1.5, %v1275
    %v1277 = vmul.f32 %v1272, %v1276
    %vm1278 = vweird.f32 %v1271
    %vm1279 = vweird.f32 %v1272
    %vm1280 = vmor %vm1278, %vm1279
    %v1281 = vsel %vm1280, %v1272, %v1277
    %v1282 = vmul.f32 %v1266, %v1281
    %v1283 = vperm.slane %v186, 0
    %v1284 = vmul.f32 %v1282, %v1283
    %v1285 = vperm.slane %v187, 0
    %v1286 = vadd.f32 %v1284, %v1285
    %v1287 = vmul.f32 %v1286, 0.5
    %v1288 = vmul.f32 %v1286, 0.044715
    %v1289 = vmul.f32 %v1288, %v1286
    %v1290 = vmul.f32 %v1289, %v1286
    %v1291 = vadd.f32 %v1286, %v1290
    %v1292 = vmul.f32 %v1291, 0.7978846
    %v1293 = vtanh.pop %v1292
    %v1294 = vadd.f32 %v1293, 1.0
    %v1295 = vmul.f32 %v1287, %v1294
    %s1296 = smul.u32 8, 16
    %s1297 = smul.u32 %s1296, 8
    %s1298 = sshll.u32 %s1297, 4
    %1299 = dma.done [#allocation3], %s1298
    %v1300 = vld [vmem:[#allocation2] sm:$0xff]
    %v1301 = vld [vmem:[#allocation2 + $0x8] sm:$0xff]
    %v1302 = vld [vmem:[#allocation2 + $0x10] sm:$0xff]
    %v1303 = vld [vmem:[#allocation2 + $0x18] sm:$0xff]
    %v1304 = vld [vmem:[#allocation2 + $0x20] sm:$0xff]
    %v1305 = vld [vmem:[#allocation2 + $0x28] sm:$0xff]
    %v1306 = vld [vmem:[#allocation2 + $0x30] sm:$0xff]
    %v1307 = vld [vmem:[#allocation2 + $0x38] sm:$0xff]
    %v1308 = vld [vmem:[#allocation2 + $0x40] sm:$0xff]
    %v1309 = vld [vmem:[#allocation2 + $0x48] sm:$0xff]
    %v1310 = vld [vmem:[#allocation2 + $0x50] sm:$0xff]
    %v1311 = vld [vmem:[#allocation2 + $0x58] sm:$0xff]
    %v1312 = vld [vmem:[#allocation2 + $0x60] sm:$0xff]
    %v1313 = vld [vmem:[#allocation2 + $0x68] sm:$0xff]
    %v1314 = vld [vmem:[#allocation2 + $0x70] sm:$0xff]
    %v1315 = vld [vmem:[#allocation2 + $0x78] sm:$0xff]
    %v1316 = vld [vmem:[#allocation2 + $0x80] sm:$0xff]
    %v1317 = vld [vmem:[#allocation2 + $0x88] sm:$0xff]
    %v1318 = vld [vmem:[#allocation2 + $0x90] sm:$0xff]
    %v1319 = vld [vmem:[#allocation2 + $0x98] sm:$0xff]
    %v1320 = vld [vmem:[#allocation2 + $0xa0] sm:$0xff]
    %v1321 = vld [vmem:[#allocation2 + $0xa8] sm:$0xff]
    %v1322 = vld [vmem:[#allocation2 + $0xb0] sm:$0xff]
    %v1323 = vld [vmem:[#allocation2 + $0xb8] sm:$0xff]
    %v1324 = vld [vmem:[#allocation2 + $0xc0] sm:$0xff]
    %v1325 = vld [vmem:[#allocation2 + $0xc8] sm:$0xff]
    %v1326 = vld [vmem:[#allocation2 + $0xd0] sm:$0xff]
    %v1327 = vld [vmem:[#allocation2 + $0xd8] sm:$0xff]
    %v1328 = vld [vmem:[#allocation2 + $0xe0] sm:$0xff]
    %v1329 = vld [vmem:[#allocation2 + $0xe8] sm:$0xff]
    %v1330 = vld [vmem:[#allocation2 + $0xf0] sm:$0xff]
    %v1331 = vld [vmem:[#allocation2 + $0xf8] sm:$0xff]
    %v1332 = vld [vmem:[#allocation2 + $0x100] sm:$0xff]
    %v1333 = vld [vmem:[#allocation2 + $0x108] sm:$0xff]
    %v1334 = vld [vmem:[#allocation2 + $0x110] sm:$0xff]
    %v1335 = vld [vmem:[#allocation2 + $0x118] sm:$0xff]
    %v1336 = vld [vmem:[#allocation2 + $0x120] sm:$0xff]
    %v1337 = vld [vmem:[#allocation2 + $0x128] sm:$0xff]
    %v1338 = vld [vmem:[#allocation2 + $0x130] sm:$0xff]
    %v1339 = vld [vmem:[#allocation2 + $0x138] sm:$0xff]
    %v1340 = vld [vmem:[#allocation2 + $0x140] sm:$0xff]
    %v1341 = vld [vmem:[#allocation2 + $0x148] sm:$0xff]
    %v1342 = vld [vmem:[#allocation2 + $0x150] sm:$0xff]
    %v1343 = vld [vmem:[#allocation2 + $0x158] sm:$0xff]
    %v1344 = vld [vmem:[#allocation2 + $0x160] sm:$0xff]
    %v1345 = vld [vmem:[#allocation2 + $0x168] sm:$0xff]
    %v1346 = vld [vmem:[#allocation2 + $0x170] sm:$0xff]
    %v1347 = vld [vmem:[#allocation2 + $0x178] sm:$0xff]
    %v1348 = vld [vmem:[#allocation2 + $0x180] sm:$0xff]
    %v1349 = vld [vmem:[#allocation2 + $0x188] sm:$0xff]
    %v1350 = vld [vmem:[#allocation2 + $0x190] sm:$0xff]
    %v1351 = vld [vmem:[#allocation2 + $0x198] sm:$0xff]
    %v1352 = vld [vmem:[#allocation2 + $0x1a0] sm:$0xff]
    %v1353 = vld [vmem:[#allocation2 + $0x1a8] sm:$0xff]
    %v1354 = vld [vmem:[#allocation2 + $0x1b0] sm:$0xff]
    %v1355 = vld [vmem:[#allocation2 + $0x1b8] sm:$0xff]
    %v1356 = vld [vmem:[#allocation2 + $0x1c0] sm:$0xff]
    %v1357 = vld [vmem:[#allocation2 + $0x1c8] sm:$0xff]
    %v1358 = vld [vmem:[#allocation2 + $0x1d0] sm:$0xff]
    %v1359 = vld [vmem:[#allocation2 + $0x1d8] sm:$0xff]
    %v1360 = vld [vmem:[#allocation2 + $0x1e0] sm:$0xff]
    %v1361 = vld [vmem:[#allocation2 + $0x1e8] sm:$0xff]
    %v1362 = vld [vmem:[#allocation2 + $0x1f0] sm:$0xff]
    %v1363 = vld [vmem:[#allocation2 + $0x1f8] sm:$0xff]
    %v1364 = vld [vmem:[#allocation2 + $0x200] sm:$0xff]
    %v1365 = vld [vmem:[#allocation2 + $0x208] sm:$0xff]
    %v1366 = vld [vmem:[#allocation2 + $0x210] sm:$0xff]
    %v1367 = vld [vmem:[#allocation2 + $0x218] sm:$0xff]
    %v1368 = vld [vmem:[#allocation2 + $0x220] sm:$0xff]
    %v1369 = vld [vmem:[#allocation2 + $0x228] sm:$0xff]
    %v1370 = vld [vmem:[#allocation2 + $0x230] sm:$0xff]
    %v1371 = vld [vmem:[#allocation2 + $0x238] sm:$0xff]
    %v1372 = vld [vmem:[#allocation2 + $0x240] sm:$0xff]
    %v1373 = vld [vmem:[#allocation2 + $0x248] sm:$0xff]
    %v1374 = vld [vmem:[#allocation2 + $0x250] sm:$0xff]
    %v1375 = vld [vmem:[#allocation2 + $0x258] sm:$0xff]
    %v1376 = vld [vmem:[#allocation2 + $0x260] sm:$0xff]
    %v1377 = vld [vmem:[#allocation2 + $0x268] sm:$0xff]
    %v1378 = vld [vmem:[#allocation2 + $0x270] sm:$0xff]
    %v1379 = vld [vmem:[#allocation2 + $0x278] sm:$0xff]
    %v1380 = vld [vmem:[#allocation2 + $0x280] sm:$0xff]
    %v1381 = vld [vmem:[#allocation2 + $0x288] sm:$0xff]
    %v1382 = vld [vmem:[#allocation2 + $0x290] sm:$0xff]
    %v1383 = vld [vmem:[#allocation2 + $0x298] sm:$0xff]
    %v1384 = vld [vmem:[#allocation2 + $0x2a0] sm:$0xff]
    %v1385 = vld [vmem:[#allocation2 + $0x2a8] sm:$0xff]
    %v1386 = vld [vmem:[#allocation2 + $0x2b0] sm:$0xff]
    %v1387 = vld [vmem:[#allocation2 + $0x2b8] sm:$0xff]
    %v1388 = vld [vmem:[#allocation2 + $0x2c0] sm:$0xff]
    %v1389 = vld [vmem:[#allocation2 + $0x2c8] sm:$0xff]
    %v1390 = vld [vmem:[#allocation2 + $0x2d0] sm:$0xff]
    %v1391 = vld [vmem:[#allocation2 + $0x2d8] sm:$0xff]
    %v1392 = vld [vmem:[#allocation2 + $0x2e0] sm:$0xff]
    %v1393 = vld [vmem:[#allocation2 + $0x2e8] sm:$0xff]
    %v1394 = vld [vmem:[#allocation2 + $0x2f0] sm:$0xff]
    %v1395 = vld [vmem:[#allocation2 + $0x2f8] sm:$0xff]
    %v1396 = vld [vmem:[#allocation2 + $0x300] sm:$0xff]
    %v1397 = vld [vmem:[#allocation2 + $0x308] sm:$0xff]
    %v1398 = vld [vmem:[#allocation2 + $0x310] sm:$0xff]
    %v1399 = vld [vmem:[#allocation2 + $0x318] sm:$0xff]
    %v1400 = vld [vmem:[#allocation2 + $0x320] sm:$0xff]
    %v1401 = vld [vmem:[#allocation2 + $0x328] sm:$0xff]
    %v1402 = vld [vmem:[#allocation2 + $0x330] sm:$0xff]
    %v1403 = vld [vmem:[#allocation2 + $0x338] sm:$0xff]
    %v1404 = vld [vmem:[#allocation2 + $0x340] sm:$0xff]
    %v1405 = vld [vmem:[#allocation2 + $0x348] sm:$0xff]
    %v1406 = vld [vmem:[#allocation2 + $0x350] sm:$0xff]
    %v1407 = vld [vmem:[#allocation2 + $0x358] sm:$0xff]
    %v1408 = vld [vmem:[#allocation2 + $0x360] sm:$0xff]
    %v1409 = vld [vmem:[#allocation2 + $0x368] sm:$0xff]
    %v1410 = vld [vmem:[#allocation2 + $0x370] sm:$0xff]
    %v1411 = vld [vmem:[#allocation2 + $0x378] sm:$0xff]
    %v1412 = vld [vmem:[#allocation2 + $0x380] sm:$0xff]
    %v1413 = vld [vmem:[#allocation2 + $0x388] sm:$0xff]
    %v1414 = vld [vmem:[#allocation2 + $0x390] sm:$0xff]
    %v1415 = vld [vmem:[#allocation2 + $0x398] sm:$0xff]
    %v1416 = vld [vmem:[#allocation2 + $0x3a0] sm:$0xff]
    %v1417 = vld [vmem:[#allocation2 + $0x3a8] sm:$0xff]
    %v1418 = vld [vmem:[#allocation2 + $0x3b0] sm:$0xff]
    %v1419 = vld [vmem:[#allocation2 + $0x3b8] sm:$0xff]
    %v1420 = vld [vmem:[#allocation2 + $0x3c0] sm:$0xff]
    %v1421 = vld [vmem:[#allocation2 + $0x3c8] sm:$0xff]
    %v1422 = vld [vmem:[#allocation2 + $0x3d0] sm:$0xff]
    %v1423 = vld [vmem:[#allocation2 + $0x3d8] sm:$0xff]
    %v1424 = vld [vmem:[#allocation2 + $0x3e0] sm:$0xff]
    %v1425 = vld [vmem:[#allocation2 + $0x3e8] sm:$0xff]
    %v1426 = vld [vmem:[#allocation2 + $0x3f0] sm:$0xff]
    %v1427 = vld [vmem:[#allocation2 + $0x3f8] sm:$0xff]
    %1428 = vmatpush.msra.mxu0 %v1420
    %1429 = vmatpush.msra.mxu0 %v1412
    %1430 = vmatpush.msra.mxu0 %v1404
    %1431 = vmatpush.msra.mxu0 %v1396
    %1432 = vmatpush.msra.mxu0 %v1388
    %1433 = vmatpush.msra.mxu0 %v1380
    %1434 = vmatpush.msra.mxu0 %v1372
    %1435 = vmatpush.msra.mxu0 %v1364
    %1436 = vmatpush.msra.mxu0 %v1356
    %1437 = vmatpush.msra.mxu0 %v1348
    %1438 = vmatpush.msra.mxu0 %v1340
    %1439 = vmatpush.msra.mxu0 %v1332
    %1440 = vmatpush.msra.mxu0 %v1324
    %1441 = vmatpush.msra.mxu0 %v1316
    %1442 = vmatpush.msra.mxu0 %v1308
    %1443 = vmatpush.msra.mxu0 %v1300
    %1444 = vmatmul.f32.gmra.mxu0 %v1295
    %v1445 = vpop.f32.mrf.mxu0
    %v1446 = vadd.f32 0.0, %v1445
    %1447 = vdwg.mxu0
    %1448 = vmatpush.msra.mxu0 %v1421
    %1449 = vmatpush.msra.mxu0 %v1413
    %1450 = vmatpush.msra.mxu0 %v1405
    %1451 = vmatpush.msra.mxu0 %v1397
    %1452 = vmatpush.msra.mxu0 %v1389
    %1453 = vmatpush.msra.mxu0 %v1381
    %1454 = vmatpush.msra.mxu0 %v1373
    %1455 = vmatpush.msra.mxu0 %v1365
    %1456 = vmatpush.msra.mxu0 %v1357
    %1457 = vmatpush.msra.mxu0 %v1349
    %1458 = vmatpush.msra.mxu0 %v1341
    %1459 = vmatpush.msra.mxu0 %v1333
    %1460 = vmatpush.msra.mxu0 %v1325
    %1461 = vmatpush.msra.mxu0 %v1317
    %1462 = vmatpush.msra.mxu0 %v1309
    %1463 = vmatpush.msra.mxu0 %v1301
    %1464 = vmatmul.f32.gmra.mxu0 %v1295
    %v1465 = vpop.f32.mrf.mxu0
    %v1466 = vadd.f32 0.0, %v1465
    %1467 = vdwg.mxu0
    %1468 = vmatpush.msra.mxu0 %v1422
    %1469 = vmatpush.msra.mxu0 %v1414
    %1470 = vmatpush.msra.mxu0 %v1406
    %1471 = vmatpush.msra.mxu0 %v1398
    %1472 = vmatpush.msra.mxu0 %v1390
    %1473 = vmatpush.msra.mxu0 %v1382
    %1474 = vmatpush.msra.mxu0 %v1374
    %1475 = vmatpush.msra.mxu0 %v1366
    %1476 = vmatpush.msra.mxu0 %v1358
    %1477 = vmatpush.msra.mxu0 %v1350
    %1478 = vmatpush.msra.mxu0 %v1342
    %1479 = vmatpush.msra.mxu0 %v1334
    %1480 = vmatpush.msra.mxu0 %v1326
    %1481 = vmatpush.msra.mxu0 %v1318
    %1482 = vmatpush.msra.mxu0 %v1310
    %1483 = vmatpush.msra.mxu0 %v1302
    %1484 = vmatmul.f32.gmra.mxu0 %v1295
    %v1485 = vpop.f32.mrf.mxu0
    %v1486 = vadd.f32 0.0, %v1485
    %1487 = vdwg.mxu0
    %1488 = vmatpush.msra.mxu0 %v1423
    %1489 = vmatpush.msra.mxu0 %v1415
    %1490 = vmatpush.msra.mxu0 %v1407
    %1491 = vmatpush.msra.mxu0 %v1399
    %1492 = vmatpush.msra.mxu0 %v1391
    %1493 = vmatpush.msra.mxu0 %v1383
    %1494 = vmatpush.msra.mxu0 %v1375
    %1495 = vmatpush.msra.mxu0 %v1367
    %1496 = vmatpush.msra.mxu0 %v1359
    %1497 = vmatpush.msra.mxu0 %v1351
    %1498 = vmatpush.msra.mxu0 %v1343
    %1499 = vmatpush.msra.mxu0 %v1335
    %1500 = vmatpush.msra.mxu0 %v1327
    %1501 = vmatpush.msra.mxu0 %v1319
    %1502 = vmatpush.msra.mxu0 %v1311
    %1503 = vmatpush.msra.mxu0 %v1303
    %1504 = vmatmul.f32.gmra.mxu0 %v1295
    %v1505 = vpop.f32.mrf.mxu0
    %v1506 = vadd.f32 0.0, %v1505
    %1507 = vdwg.mxu0
    %1508 = vmatpush.msra.mxu0 %v1424
    %1509 = vmatpush.msra.mxu0 %v1416
    %1510 = vmatpush.msra.mxu0 %v1408
    %1511 = vmatpush.msra.mxu0 %v1400
    %1512 = vmatpush.msra.mxu0 %v1392
    %1513 = vmatpush.msra.mxu0 %v1384
    %1514 = vmatpush.msra.mxu0 %v1376
    %1515 = vmatpush.msra.mxu0 %v1368
    %1516 = vmatpush.msra.mxu0 %v1360
    %1517 = vmatpush.msra.mxu0 %v1352
    %1518 = vmatpush.msra.mxu0 %v1344
    %1519 = vmatpush.msra.mxu0 %v1336
    %1520 = vmatpush.msra.mxu0 %v1328
    %1521 = vmatpush.msra.mxu0 %v1320
    %1522 = vmatpush.msra.mxu0 %v1312
    %1523 = vmatpush.msra.mxu0 %v1304
    %1524 = vmatmul.f32.gmra.mxu0 %v1295
    %v1525 = vpop.f32.mrf.mxu0
    %v1526 = vadd.f32 0.0, %v1525
    %1527 = vdwg.mxu0
    %1528 = vmatpush.msra.mxu0 %v1425
    %1529 = vmatpush.msra.mxu0 %v1417
    %1530 = vmatpush.msra.mxu0 %v1409
    %1531 = vmatpush.msra.mxu0 %v1401
    %1532 = vmatpush.msra.mxu0 %v1393
    %1533 = vmatpush.msra.mxu0 %v1385
    %1534 = vmatpush.msra.mxu0 %v1377
    %1535 = vmatpush.msra.mxu0 %v1369
    %1536 = vmatpush.msra.mxu0 %v1361
    %1537 = vmatpush.msra.mxu0 %v1353
    %1538 = vmatpush.msra.mxu0 %v1345
    %1539 = vmatpush.msra.mxu0 %v1337
    %1540 = vmatpush.msra.mxu0 %v1329
    %1541 = vmatpush.msra.mxu0 %v1321
    %1542 = vmatpush.msra.mxu0 %v1313
    %1543 = vmatpush.msra.mxu0 %v1305
    %1544 = vmatmul.f32.gmra.mxu0 %v1295
    %v1545 = vpop.f32.mrf.mxu0
    %v1546 = vadd.f32 0.0, %v1545
    %1547 = vdwg.mxu0
    %1548 = vmatpush.msra.mxu0 %v1426
    %1549 = vmatpush.msra.mxu0 %v1418
    %1550 = vmatpush.msra.mxu0 %v1410
    %1551 = vmatpush.msra.mxu0 %v1402
    %1552 = vmatpush.msra.mxu0 %v1394
    %1553 = vmatpush.msra.mxu0 %v1386
    %1554 = vmatpush.msra.mxu0 %v1378
    %1555 = vmatpush.msra.mxu0 %v1370
    %1556 = vmatpush.msra.mxu0 %v1362
    %1557 = vmatpush.msra.mxu0 %v1354
    %1558 = vmatpush.msra.mxu0 %v1346
    %1559 = vmatpush.msra.mxu0 %v1338
    %1560 = vmatpush.msra.mxu0 %v1330
    %1561 = vmatpush.msra.mxu0 %v1322
    %1562 = vmatpush.msra.mxu0 %v1314
    %1563 = vmatpush.msra.mxu0 %v1306
    %1564 = vmatmul.f32.gmra.mxu0 %v1295
    %v1565 = vpop.f32.mrf.mxu0
    %v1566 = vadd.f32 0.0, %v1565
    %1567 = vdwg.mxu0
    %1568 = vmatpush.msra.mxu0 %v1427
    %1569 = vmatpush.msra.mxu0 %v1419
    %1570 = vmatpush.msra.mxu0 %v1411
    %1571 = vmatpush.msra.mxu0 %v1403
    %1572 = vmatpush.msra.mxu0 %v1395
    %1573 = vmatpush.msra.mxu0 %v1387
    %1574 = vmatpush.msra.mxu0 %v1379
    %1575 = vmatpush.msra.mxu0 %v1371
    %1576 = vmatpush.msra.mxu0 %v1363
    %1577 = vmatpush.msra.mxu0 %v1355
    %1578 = vmatpush.msra.mxu0 %v1347
    %1579 = vmatpush.msra.mxu0 %v1339
    %1580 = vmatpush.msra.mxu0 %v1331
    %1581 = vmatpush.msra.mxu0 %v1323
    %1582 = vmatpush.msra.mxu0 %v1315
    %1583 = vmatpush.msra.mxu0 %v1307
    %1584 = vmatmul.f32.gmra.mxu0 %v1295
    %v1585 = vpop.f32.mrf.mxu0
    %v1586 = vadd.f32 0.0, %v1585
    %1587 = vdwg.mxu0
    %v1588 = vsel %vm1219, %v1446, %v1466
    %v1589 = vsel %vm1221, %v1588, %v1486
    %v1590 = vsel %vm1223, %v1589, %v1506
    %v1591 = vsel %vm1225, %v1590, %v1526
    %v1592 = vsel %vm1227, %v1591, %v1546
    %v1593 = vsel %vm1229, %v1592, %v1566
    %v1594 = vsel %vm1231, %v1593, %v1586
    %v1595 = vadd.f32 %v1594, %v188
    %v1596 = vmul.f32 %v1595, 2.5
    %v1597 = vxor.u32 %v1596, 2147483648
    %v1598 = vmul.f32 %v1597, 1.442695
    %v1599 = vpow.pop %v1598
    %v1600 = vadd.f32 %v1599, 1.0
    %v1601 = vrcp.pop %v1600
    %v1602 = vmul.f32 %v1600, %v1601
    %v1603 = vsub.f32 1.0, %v1602
    %v1604 = vmul.f32 %v1601, %v1603
    %v1605 = vadd.f32 %v1601, %v1604
    %vm1606 = vweird.f32 %v1600
    %vm1607 = vweird.f32 %v1601
    %vm1608 = vmor %vm1606, %vm1607
    %v1609 = vsel %vm1608, %v1601, %v1605
    %v1610 = vand.u32 2147483647, %v1600
    %vm1611 = vcmp.eq.f32.partialorder %v1610, 8.507059e+37
    %v1612 = vand.u32 %v1600, 2147483648
    %v1613 = vor.u32 1.1754944e-38, %v1612
    %v1614 = vsel %vm1611, %v1613, %v1609
    %v1615 = vmul.f32 1.0, %v1614
    %1616 = vst [vmem:[#allocation13] sm:$0xff] %v1615
    // Predicated region
    $region50: #{tpu_custom_call.1} parent=1 // pred_check
      _
    $region51: #{tpu_custom_call.1} parent=1 // pred_check_branch
      %1618 = sbr.rel (0) target = $region53
    $region52: #{tpu_custom_call.1} parent=1 // pred_region
      %1620 = vsyncadd [#allocation6], 0
      %s1622 = sshll.u32 [#allocation13], 4
      %s1623 = int_to_ptr.vmem [resolvable:$true] %s1622
      %s1624 = sshll.u32 %s7, 4
      %s1625 = int_to_ptr.hbm [resolvable:$true] %s1624
      %1627 = dma.vmem_to_hbm [thread:$0]  %s1623, 128, %s1625, [#allocation6]
    $region53: #{tpu_custom_call.1} parent=1 // pred_fallthru
      _
    // Predicated region
    $region54: #{tpu_custom_call.1} parent=1 // pred_check
      _
    $region55: #{tpu_custom_call.1} parent=1 // pred_check_branch
      %1629 = sbr.rel (0) target = $region57
    $region56: #{tpu_custom_call.1} parent=1 // pred_region
      %1631 = dma.done [#allocation6], 128
    $region57: #{tpu_custom_call.1} parent=1 // pred_fallthru
      _
    %1632 = vsyncpa [#allocation5], 1
    %1633 = vsyncpa [#allocation8], 1
    %1634 = vsyncpa [#allocation11], 1
    %1635 = vsyncpa [#allocation6], 1
  %1636 = vsyncmov [#allocation3]
  %s1637 = vpop.sfrf %1636
  %p1638 = scmp.eq.s32.totalorder %s1637, 0
  %p1639 = pneg %p1638
  %1641 = shalt.err (%p1639)

</llo_original>
